<compile_context>
chip_gen: v7x
topology: tpu7x:2x2x1
jax: 0.10.0
libtpu: 0.0.40
codegen_flags: <defaults>
</compile_context>

<pallas_src>
import functools

import jax
import jax.numpy as jnp
from jax import lax
from jax.experimental import pallas as pl
from jax.experimental.pallas import tpu as pltpu


# ---------------- small, deterministic hyperparameters ----------------
class hp:
    ref_enc_filters = [4, 8]   # K = 2 conv layers
    n_mels = 16
    E = 32                     # GRU hidden size = E // 2 = 16


def calculate_channels(L, kernel_size, stride, pad, n_convs):
    for _ in range(n_convs):
        L = (L - kernel_size + 2 * pad) // stride + 1
    return L


# ---------------- fused Pallas kernel (convs + BN + ReLU + GRU) ----------------
def fused_ref_encoder_kernel(
        x_ref,
        a1_ref, sel1_ref, selt1_ref, g1_ref, beta1_ref,
        a2_ref, sel2_ref, selt2_ref, g2_ref, beta2_ref,
        wi_ref, bi_ref, wh_ref, bhn_ref,
        h_ref):
    n = x_ref.shape[0]
    eps = 1e-5

    def conv_bn_relu(x, a_ref, sel_ref, selt_ref, g_ref, b_ref):
        # Conv as ONE dense matmul (operator precomputed host-side).  Operands
        # may be bf16; accumulation and BN statistics stay f32.
        y = jnp.dot(x.astype(a_ref.dtype), a_ref[...],
                    preferred_element_type=jnp.float32)                     # [N, Fout] f32
        c = sel_ref.shape[1]
        m = float(n * a_ref.shape[1] // c)        # N * Hout * Wout per channel
        # One-pass batch stats; colsum & colsq stacked -> ONE selection matmul.
        stats = jnp.concatenate(
            [jnp.sum(y, axis=0, keepdims=True),
             jnp.sum(y * y, axis=0, keepdims=True)], axis=0)                # [2, Fout]
        s = jnp.dot(stats, sel_ref[...], preferred_element_type=jnp.float32)  # [2, C]
        mu = s[0:1, :] / m
        var = jnp.maximum(s[1:2, :] / m - mu * mu, 0.0)
        scale_c = g_ref[...] * lax.rsqrt(var + eps)                         # [1, C]
        shift_c = b_ref[...] - mu * scale_c                                 # [1, C]
        # Broadcast per-channel affine back to all columns: ONE matmul w/ Sel^T.
        aff = jnp.dot(jnp.concatenate([scale_c, shift_c], axis=0),
                      selt_ref[...], preferred_element_type=jnp.float32)    # [2, Fout]
        return jnp.maximum(y * aff[0:1, :] + aff[1:2, :], 0.0)

    act1 = conv_bn_relu(x_ref[...], a1_ref, sel1_ref, selt1_ref, g1_ref, beta1_ref)
    # Layer-2 output columns are in (t, c, w) order == the GRU input layout.
    xg = conv_bn_relu(act1, a2_ref, sel2_ref, selt2_ref, g2_ref, beta2_ref)   # [N, T*D]

    hid = wh_ref.shape[0]
    t3 = 3 * hid
    t_steps = wi_ref.shape[1] // t3

    # ONE fused input-projection GEMM for all gates and all timesteps
    # (block-diagonal operator; replaces 3*T tiny matmuls).  Per-step gate
    # pre-activations are static lane slices of a lane-dense [N, T*3H] tile.
    gi = jnp.dot(xg.astype(wi_ref.dtype), wi_ref[...],
                 preferred_element_type=jnp.float32) + bi_ref[...]           # [N, T*3H]

    wh = wh_ref[...]     # [H, 3H] = [whr | whz | whn]; recurrence kept in f32
    bhn = bhn_ref[...]   # [1, H]

    # Fully unrolled recurrence (T is compile-time static and small here).
    # TODO(synk): for large T, stage `gi` in a VMEM scratch ref and switch to
    # lax.fori_loop(..., unroll=2..4) to bound vreg live ranges.
    h = jnp.zeros((n, hid), dtype=jnp.float32)
    for t in range(t_steps):
        gi_t = gi[:, t * t3:(t + 1) * t3]
        # ONE matmul per step on the serial chain (r, z and h@Whn all depend
        # only on h, so fusing them is exact).
        gh = jnp.dot(h, wh, preferred_element_type=jnp.float32)              # [N, 3H]
        r = jax.nn.sigmoid(gi_t[:, 0:hid] + gh[:, 0:hid])
        z = jax.nn.sigmoid(gi_t[:, hid:2 * hid] + gh[:, hid:2 * hid])
        ng = jnp.tanh(gi_t[:, 2 * hid:t3] + r * (gh[:, 2 * hid:t3] + bhn))
        h = (1.0 - z) * ng + z * h

    h_ref[...] = h


# ---------------- host-side parameter setup / operator precompute ----------------
def _conv_as_matrix(w_oihw, in_hwc, out_order):
    """Dense operator A with flatten_hwc(x) @ A == flatten(conv2d(x; 3x3, s=2, p=1))."""
    h, w, c = in_hwc
    w_hwio = jnp.transpose(w_oihw, (2, 3, 1, 0))                 # [3,3,Cin,Cout]
    basis = jnp.eye(h * w * c, dtype=jnp.float32).reshape(h * w * c, h, w, c)
    y = lax.conv_general_dilated(
        basis, w_hwio, window_strides=(2, 2), padding=((1, 1), (1, 1)),
        dimension_numbers=('NHWC', 'HWIO', 'NHWC'),
        precision=lax.Precision.HIGHEST)
    _, ho, wo, co = y.shape
    if out_order == 'hwc':        # NHWC flatten (feeds the next conv layer)
        a = y.reshape(h * w * c, ho * wo * co)
        labels = jnp.broadcast_to(jnp.arange(co)[None, None, :], (ho, wo, co)).reshape(-1)
    else:                         # 'hcw' flatten (matches GRU feature layout)
        a = jnp.transpose(y, (0, 1, 3, 2)).reshape(h * w * c, ho * co * wo)
        labels = jnp.broadcast_to(jnp.arange(co)[None, :, None], (ho, co, wo)).reshape(-1)
    sel = (labels[:, None] == jnp.arange(co)[None, :]).astype(jnp.float32)  # [Fout, C]
    return a, sel, sel.T, (ho, wo, co)


def init_params(key):
    K = len(hp.ref_enc_filters)
    filters = [1] + hp.ref_enc_filters
    params = {"convs": []}
    for i in range(K):
        key, k1, k2, k3 = jax.random.split(key, 4)
        cin, cout = filters[i], filters[i + 1]
        params["convs"].append({
            # Conv bias omitted: it cancels exactly under training-mode BatchNorm.
            "w": 0.1 * jax.random.normal(k1, (cout, cin, 3, 3), jnp.float32),  # PyTorch layout
            "gamma": 1.0 + 0.1 * jax.random.normal(k2, (cout,), jnp.float32),
            "beta": 0.1 * jax.random.normal(k3, (cout,), jnp.float32),
        })

    out_channels = calculate_channels(hp.n_mels, 3, 2, 1, K)
    d = hp.ref_enc_filters[-1] * out_channels
    h = hp.E // 2
    scale = 1.0 / (h ** 0.5)     # PyTorch GRU default init range
    gru = {}
    for name, shape in [("wir", (d, h)), ("wiz", (d, h)), ("win", (d, h)),
                        ("whr", (h, h)), ("whz", (h, h)), ("whn", (h, h)),
                        ("bir", (h,)), ("biz", (h,)), ("bin", (h,)),
                        ("bhr", (h,)), ("bhz", (h,)), ("bhn", (h,))]:
        key, k = jax.random.split(key)
        gru[name] = jax.random.uniform(k, shape, jnp.float32, -scale, scale)
    params["gru"] = gru
    return params


def prepare_tables(params, ty, use_bf16=True):
    """Precompute dense conv operators, BN selection matrices, the fused
    block-diagonal GRU input operator and the fused hidden operator for a
    fixed input length `ty`."""
    c1, c2 = params["convs"]
    a1, sel1, selt1, (h1, w1, co1) = _conv_as_matrix(c1["w"], (ty, hp.n_mels, 1), 'hwc')
    a2, sel2, selt2, (h2, w2, co2) = _conv_as_matrix(c2["w"], (h1, w1, co1), 'hcw')

    t_steps = h2
    d = co2 * w2
    f2 = a2.shape[1]             # == t_steps * d
    hid = hp.E // 2
    gru = params["gru"]

    # ONE block-diagonal input-projection operator [T*D, T*3H]: block t maps
    # step-t features to that step's [r|z|n] pre-activations.  b_hr/b_hz are
    # folded into the input bias (they sit outside the reset-gate product);
    # b_hn must stay inside r*(.) and is passed separately.
    # TODO(synk): this operator is quadratic in T (75% zeros); for long Ty
    # switch to per-step [D,3H] matmuls / a time-gridded BlockSpec to stay
    # linear in T and inside v7x's 64 MiB VMEM.
    wi_step = jnp.concatenate([gru["wir"], gru["wiz"], gru["win"]], axis=1)   # [D, 3H]
    wi_all = jnp.zeros((f2, t_steps * 3 * hid), jnp.float32)
    for t in range(t_steps):
        wi_all = wi_all.at[t * d:(t + 1) * d,
                           t * 3 * hid:(t + 1) * 3 * hid].set(wi_step)
    bi_step = jnp.concatenate([gru["bir"] + gru["bhr"],
                               gru["biz"] + gru["bhz"],
                               gru["bin"]], axis=0).reshape(1, 3 * hid)
    bi_all = jnp.tile(bi_step, (1, t_steps))                                  # [1, T*3H]

    # ONE fused hidden-state operator [H, 3H] (3 serial matmuls/step -> 1).
    wh_all = jnp.concatenate([gru["whr"], gru["whz"], gru["whn"]], axis=1)

    wdt = jnp.bfloat16 if use_bf16 else jnp.float32
    return dict(
        a1=a1.astype(wdt), sel1=sel1, selt1=selt1,
        g1=c1["gamma"].reshape(1, -1), beta1=c1["beta"].reshape(1, -1),
        a2=a2.astype(wdt), sel2=sel2, selt2=selt2,
        g2=c2["gamma"].reshape(1, -1), beta2=c2["beta"].reshape(1, -1),
        wi_all=wi_all.astype(wdt), bi_all=bi_all,
        wh_all=wh_all, bhn=gru["bhn"].reshape(1, -1),
    )


_TABLE_ORDER = ("a1", "sel1", "selt1", "g1", "beta1",
                "a2", "sel2", "selt2", "g2", "beta2",
                "wi_all", "bi_all", "wh_all", "bhn")


def reference_encoder(inputs, tables):
    # inputs: [N, Ty, n_mels]; PyTorch's view(N,1,-1,n_mels) == NHWC [N,Ty,n_mels,1],
    # whose (h,w,c) flatten is just reshape(N, Ty*n_mels).
    n = inputs.shape[0]
    hid = tables["wh_all"].shape[0]
    x_flat = inputs.reshape(n, -1)
    args = (x_flat,) + tuple(tables[k] for k in _TABLE_ORDER)
    vmem = pl.BlockSpec(memory_space=pltpu.MemorySpace.VMEM)
    # Scoped-VMEM budget sized to the actual table footprint (+headroom).
    footprint = sum(int(a.size) * a.dtype.itemsize for a in args) + n * hid * 4
    vmem_limit = int(min(max(2 * footprint + (4 << 20), 16 << 20), 100 << 20))
    # NOTE: grid-less on purpose — training-mode BatchNorm couples all rows
    # through the batch statistics, so a batch grid (v7x dual-core sharding)
    # would change semantics without a cross-block stats reduction pass.
    return pl.pallas_call(
        fused_ref_encoder_kernel,
        out_shape=jax.ShapeDtypeStruct((n, hid), jnp.float32),
        in_specs=[vmem] * len(args),
        out_specs=vmem,
        compiler_params=pltpu.CompilerParams(vmem_limit_bytes=vmem_limit),
    )(*args)


# ---------------- pure-JAX reference (for the numerical self-check) ----------------
def reference_forward_jax(inputs, params):
    dot_hp = functools.partial(jnp.dot, precision=lax.Precision.HIGHEST)
    n = inputs.shape[0]
    x = inputs.reshape(n, -1, hp.n_mels, 1)                      # NHWC
    for layer in params["convs"]:
        w_hwio = jnp.transpose(layer["w"], (2, 3, 1, 0))
        y = lax.conv_general_dilated(x, w_hwio, (2, 2), ((1, 1), (1, 1)),
                                     dimension_numbers=('NHWC', 'HWIO', 'NHWC'),
                                     precision=lax.Precision.HIGHEST)
        mu = jnp.mean(y, axis=(0, 1, 2), keepdims=True)
        var = jnp.mean((y - mu) ** 2, axis=(0, 1, 2), keepdims=True)
        y = (y - mu) * lax.rsqrt(var + 1e-5) * layer["gamma"] + layer["beta"]
        x = jnp.maximum(y, 0.0)
    nb, hh, ww, cc = x.shape
    feats = jnp.transpose(x, (0, 1, 3, 2)).reshape(nb, hh, cc * ww)   # [N, T, C*W]
    gru = params["gru"]
    h = jnp.zeros((nb, hp.E // 2), jnp.float32)
    for t in range(hh):
        xt = feats[:, t, :]
        r = jax.nn.sigmoid(dot_hp(xt, gru["wir"]) + gru["bir"] + dot_hp(h, gru["whr"]) + gru["bhr"])
        z = jax.nn.sigmoid(dot_hp(xt, gru["wiz"]) + gru["biz"] + dot_hp(h, gru["whz"]) + gru["bhz"])
        ng = jnp.tanh(dot_hp(xt, gru["win"]) + gru["bin"] + r * (dot_hp(h, gru["whn"]) + gru["bhn"]))
        h = (1.0 - z) * ng + z * h
    return h


if __name__ == "__main__":
    key = jax.random.PRNGKey(0)
    kp, kx = jax.random.split(key)
    params = init_params(kp)

    # N a multiple of 8 so f32 activation tiles use every sublane (perf review).
    N, Ty = 8, 16
    mels = jax.random.normal(kx, (N, Ty, hp.n_mels), jnp.float32)

    ref = reference_forward_jax(mels, params)

    # 1) f32 tables: tight check that the fused-matmul restructuring is exact.
    tables_f32 = prepare_tables(params, Ty, use_bf16=False)
    out_f32 = jax.jit(lambda x: reference_encoder(x, tables_f32))(mels)
    jax.block_until_ready(out_f32)
    assert out_f32.shape == (N, hp.E // 2) and out_f32.dtype == jnp.float32
    assert jnp.allclose(out_f32, ref, rtol=5e-3, atol=5e-3), "f32 kernel mismatch"

    # 2) bf16 operators (the performance configuration): deliberate numeric
    #    change per the review, so the tolerance is correspondingly looser.
    tables_bf16 = prepare_tables(params, Ty, use_bf16=True)
    out = jax.jit(lambda x: reference_encoder(x, tables_bf16))(mels)
    jax.block_until_ready(out)
    assert out.shape == (N, hp.E // 2) and out.dtype == jnp.float32
    assert jnp.allclose(out, ref, rtol=5e-2, atol=5e-2), "bf16 kernel drift too large"

    print("KERNEL_OK")
</pallas_src>

<mosaic_0001>
module attributes {stable_mosaic.version = 11 : i64} {
  func.func @fused_ref_encoder_kernel(%arg0: memref<8x256xf32, #tpu.memory_space<vmem>>, %arg1: memref<256x256xf32, #tpu.memory_space<vmem>>, %arg2: memref<256x4xf32, #tpu.memory_space<vmem>>, %arg3: memref<4x256xf32, #tpu.memory_space<vmem>>, %arg4: memref<1x4xf32, #tpu.memory_space<vmem>>, %arg5: memref<1x4xf32, #tpu.memory_space<vmem>>, %arg6: memref<256x128xf32, #tpu.memory_space<vmem>>, %arg7: memref<128x8xf32, #tpu.memory_space<vmem>>, %arg8: memref<8x128xf32, #tpu.memory_space<vmem>>, %arg9: memref<1x8xf32, #tpu.memory_space<vmem>>, %arg10: memref<1x8xf32, #tpu.memory_space<vmem>>, %arg11: memref<128x192xf32, #tpu.memory_space<vmem>>, %arg12: memref<1x192xf32, #tpu.memory_space<vmem>>, %arg13: memref<16x48xf32, #tpu.memory_space<vmem>>, %arg14: memref<1x16xf32, #tpu.memory_space<vmem>>, %arg15: memref<8x16xf32, #tpu.memory_space<vmem>>) attributes {dimension_semantics = [], scalar_prefetch = 0 : i64, scratch_operands = 0 : i64, tpu.core_type = #tpu.core_type<tc>} {
    %c0 = arith.constant 0 : index
    %c0_0 = arith.constant 0 : index
    %0 = vector.load %arg0[%c0, %c0_0] : memref<8x256xf32, #tpu.memory_space<vmem>>, vector<8x256xf32>
    %c0_1 = arith.constant 0 : index
    %c0_2 = arith.constant 0 : index
    %1 = vector.load %arg1[%c0_1, %c0_2] : memref<256x256xf32, #tpu.memory_space<vmem>>, vector<256x256xf32>
    %cst = arith.constant dense<0.000000e+00> : vector<8x256xf32>
    %2 = tpu.matmul %0, %1, %cst {dimension_numbers = #tpu.dot_dimension_numbers<[1], [0], [0], [1], [0, 0, 1, 1], [], []>} : vector<8x256xf32>, vector<256x256xf32>, vector<8x256xf32> -> vector<8x256xf32>
    %cst_3 = arith.constant dense<0.000000e+00> : vector<256xf32>
    %3 = vector.multi_reduction <add>, %2, %cst_3 [0] : vector<8x256xf32> to vector<256xf32>
    %4 = vector.shape_cast %3 : vector<256xf32> to vector<1x256xf32>
    %5 = arith.mulf %2, %2 : vector<8x256xf32>
    %cst_4 = arith.constant dense<0.000000e+00> : vector<256xf32>
    %6 = vector.multi_reduction <add>, %5, %cst_4 [0] : vector<8x256xf32> to vector<256xf32>
    %7 = vector.shape_cast %6 : vector<256xf32> to vector<1x256xf32>
    %8 = tpu.concatenate %4, %7 in 0 : vector<1x256xf32>, vector<1x256xf32> -> vector<2x256xf32>
    %c0_5 = arith.constant 0 : index
    %c0_6 = arith.constant 0 : index
    %9 = vector.load %arg2[%c0_5, %c0_6] : memref<256x4xf32, #tpu.memory_space<vmem>>, vector<256x4xf32>
    %cst_7 = arith.constant dense<0.000000e+00> : vector<2x4xf32>
    %10 = tpu.matmul %8, %9, %cst_7 {dimension_numbers = #tpu.dot_dimension_numbers<[1], [0], [0], [1], [0, 0, 1, 1], [], []>} : vector<2x256xf32>, vector<256x4xf32>, vector<2x4xf32> -> vector<2x4xf32>
    %11 = vector.extract_strided_slice %10 {offsets = [0, 0], sizes = [1, 4], strides = [1, 1]} : vector<2x4xf32> to vector<1x4xf32>
    %cst_8 = arith.constant 5.120000e+02 : f32
    %12 = vector.broadcast %cst_8 : f32 to vector<1x4xf32>
    %13 = arith.divf %11, %12 : vector<1x4xf32>
    %14 = vector.extract_strided_slice %10 {offsets = [1, 0], sizes = [1, 4], strides = [1, 1]} : vector<2x4xf32> to vector<1x4xf32>
    %cst_9 = arith.constant 5.120000e+02 : f32
    %15 = vector.broadcast %cst_9 : f32 to vector<1x4xf32>
    %16 = arith.divf %14, %15 : vector<1x4xf32>
    %17 = arith.mulf %13, %13 : vector<1x4xf32>
    %18 = arith.subf %16, %17 : vector<1x4xf32>
    %cst_10 = arith.constant 0.000000e+00 : f32
    %19 = vector.broadcast %cst_10 : f32 to vector<1x4xf32>
    %20 = arith.maximumf %18, %19 : vector<1x4xf32>
    %c0_11 = arith.constant 0 : index
    %c0_12 = arith.constant 0 : index
    %21 = vector.load %arg4[%c0_11, %c0_12] : memref<1x4xf32, #tpu.memory_space<vmem>>, vector<1x4xf32>
    %cst_13 = arith.constant 9.99999974E-6 : f32
    %22 = vector.broadcast %cst_13 : f32 to vector<1x4xf32>
    %23 = arith.addf %20, %22 : vector<1x4xf32>
    %24 = math.rsqrt %23 : vector<1x4xf32>
    %25 = arith.mulf %21, %24 : vector<1x4xf32>
    %c0_14 = arith.constant 0 : index
    %c0_15 = arith.constant 0 : index
    %26 = vector.load %arg5[%c0_14, %c0_15] : memref<1x4xf32, #tpu.memory_space<vmem>>, vector<1x4xf32>
    %27 = arith.mulf %13, %25 : vector<1x4xf32>
    %28 = arith.subf %26, %27 : vector<1x4xf32>
    %29 = tpu.concatenate %25, %28 in 0 : vector<1x4xf32>, vector<1x4xf32> -> vector<2x4xf32>
    %c0_16 = arith.constant 0 : index
    %c0_17 = arith.constant 0 : index
    %30 = vector.load %arg3[%c0_16, %c0_17] : memref<4x256xf32, #tpu.memory_space<vmem>>, vector<4x256xf32>
    %cst_18 = arith.constant dense<0.000000e+00> : vector<2x256xf32>
    %31 = tpu.matmul %29, %30, %cst_18 {dimension_numbers = #tpu.dot_dimension_numbers<[1], [0], [0], [1], [0, 0, 1, 1], [], []>} : vector<2x4xf32>, vector<4x256xf32>, vector<2x256xf32> -> vector<2x256xf32>
    %32 = vector.extract_strided_slice %31 {offsets = [0, 0], sizes = [1, 256], strides = [1, 1]} : vector<2x256xf32> to vector<1x256xf32>
    %33 = vector.broadcast %32 : vector<1x256xf32> to vector<8x256xf32>
    %34 = arith.mulf %2, %33 : vector<8x256xf32>
    %35 = vector.extract_strided_slice %31 {offsets = [1, 0], sizes = [1, 256], strides = [1, 1]} : vector<2x256xf32> to vector<1x256xf32>
    %36 = vector.broadcast %35 : vector<1x256xf32> to vector<8x256xf32>
    %37 = arith.addf %34, %36 : vector<8x256xf32>
    %cst_19 = arith.constant 0.000000e+00 : f32
    %38 = vector.broadcast %cst_19 : f32 to vector<8x256xf32>
    %39 = arith.maximumf %37, %38 : vector<8x256xf32>
    %c0_20 = arith.constant 0 : index
    %c0_21 = arith.constant 0 : index
    %40 = vector.load %arg6[%c0_20, %c0_21] : memref<256x128xf32, #tpu.memory_space<vmem>>, vector<256x128xf32>
    %cst_22 = arith.constant dense<0.000000e+00> : vector<8x128xf32>
    %41 = tpu.matmul %39, %40, %cst_22 {dimension_numbers = #tpu.dot_dimension_numbers<[1], [0], [0], [1], [0, 0, 1, 1], [], []>} : vector<8x256xf32>, vector<256x128xf32>, vector<8x128xf32> -> vector<8x128xf32>
    %cst_23 = arith.constant dense<0.000000e+00> : vector<128xf32>
    %42 = vector.multi_reduction <add>, %41, %cst_23 [0] : vector<8x128xf32> to vector<128xf32>
    %43 = vector.shape_cast %42 : vector<128xf32> to vector<1x128xf32>
    %44 = arith.mulf %41, %41 : vector<8x128xf32>
    %cst_24 = arith.constant dense<0.000000e+00> : vector<128xf32>
    %45 = vector.multi_reduction <add>, %44, %cst_24 [0] : vector<8x128xf32> to vector<128xf32>
    %46 = vector.shape_cast %45 : vector<128xf32> to vector<1x128xf32>
    %47 = tpu.concatenate %43, %46 in 0 : vector<1x128xf32>, vector<1x128xf32> -> vector<2x128xf32>
    %c0_25 = arith.constant 0 : index
    %c0_26 = arith.constant 0 : index
    %48 = vector.load %arg7[%c0_25, %c0_26] : memref<128x8xf32, #tpu.memory_space<vmem>>, vector<128x8xf32>
    %cst_27 = arith.constant dense<0.000000e+00> : vector<2x8xf32>
    %49 = tpu.matmul %47, %48, %cst_27 {dimension_numbers = #tpu.dot_dimension_numbers<[1], [0], [0], [1], [0, 0, 1, 1], [], []>} : vector<2x128xf32>, vector<128x8xf32>, vector<2x8xf32> -> vector<2x8xf32>
    %50 = vector.extract_strided_slice %49 {offsets = [0, 0], sizes = [1, 8], strides = [1, 1]} : vector<2x8xf32> to vector<1x8xf32>
    %cst_28 = arith.constant 1.280000e+02 : f32
    %51 = vector.broadcast %cst_28 : f32 to vector<1x8xf32>
    %52 = arith.divf %50, %51 : vector<1x8xf32>
    %53 = vector.extract_strided_slice %49 {offsets = [1, 0], sizes = [1, 8], strides = [1, 1]} : vector<2x8xf32> to vector<1x8xf32>
    %cst_29 = arith.constant 1.280000e+02 : f32
    %54 = vector.broadcast %cst_29 : f32 to vector<1x8xf32>
    %55 = arith.divf %53, %54 : vector<1x8xf32>
    %56 = arith.mulf %52, %52 : vector<1x8xf32>
    %57 = arith.subf %55, %56 : vector<1x8xf32>
    %cst_30 = arith.constant 0.000000e+00 : f32
    %58 = vector.broadcast %cst_30 : f32 to vector<1x8xf32>
    %59 = arith.maximumf %57, %58 : vector<1x8xf32>
    %c0_31 = arith.constant 0 : index
    %c0_32 = arith.constant 0 : index
    %60 = vector.load %arg9[%c0_31, %c0_32] : memref<1x8xf32, #tpu.memory_space<vmem>>, vector<1x8xf32>
    %cst_33 = arith.constant 9.99999974E-6 : f32
    %61 = vector.broadcast %cst_33 : f32 to vector<1x8xf32>
    %62 = arith.addf %59, %61 : vector<1x8xf32>
    %63 = math.rsqrt %62 : vector<1x8xf32>
    %64 = arith.mulf %60, %63 : vector<1x8xf32>
    %c0_34 = arith.constant 0 : index
    %c0_35 = arith.constant 0 : index
    %65 = vector.load %arg10[%c0_34, %c0_35] : memref<1x8xf32, #tpu.memory_space<vmem>>, vector<1x8xf32>
    %66 = arith.mulf %52, %64 : vector<1x8xf32>
    %67 = arith.subf %65, %66 : vector<1x8xf32>
    %68 = tpu.concatenate %64, %67 in 0 : vector<1x8xf32>, vector<1x8xf32> -> vector<2x8xf32>
    %c0_36 = arith.constant 0 : index
    %c0_37 = arith.constant 0 : index
    %69 = vector.load %arg8[%c0_36, %c0_37] : memref<8x128xf32, #tpu.memory_space<vmem>>, vector<8x128xf32>
    %cst_38 = arith.constant dense<0.000000e+00> : vector<2x128xf32>
    %70 = tpu.matmul %68, %69, %cst_38 {dimension_numbers = #tpu.dot_dimension_numbers<[1], [0], [0], [1], [0, 0, 1, 1], [], []>} : vector<2x8xf32>, vector<8x128xf32>, vector<2x128xf32> -> vector<2x128xf32>
    %71 = vector.extract_strided_slice %70 {offsets = [0, 0], sizes = [1, 128], strides = [1, 1]} : vector<2x128xf32> to vector<1x128xf32>
    %72 = vector.broadcast %71 : vector<1x128xf32> to vector<8x128xf32>
    %73 = arith.mulf %41, %72 : vector<8x128xf32>
    %74 = vector.extract_strided_slice %70 {offsets = [1, 0], sizes = [1, 128], strides = [1, 1]} : vector<2x128xf32> to vector<1x128xf32>
    %75 = vector.broadcast %74 : vector<1x128xf32> to vector<8x128xf32>
    %76 = arith.addf %73, %75 : vector<8x128xf32>
    %cst_39 = arith.constant 0.000000e+00 : f32
    %77 = vector.broadcast %cst_39 : f32 to vector<8x128xf32>
    %78 = arith.maximumf %76, %77 : vector<8x128xf32>
    %c0_40 = arith.constant 0 : index
    %c0_41 = arith.constant 0 : index
    %79 = vector.load %arg11[%c0_40, %c0_41] : memref<128x192xf32, #tpu.memory_space<vmem>>, vector<128x192xf32>
    %cst_42 = arith.constant dense<0.000000e+00> : vector<8x192xf32>
    %80 = tpu.matmul %78, %79, %cst_42 {dimension_numbers = #tpu.dot_dimension_numbers<[1], [0], [0], [1], [0, 0, 1, 1], [], []>} : vector<8x128xf32>, vector<128x192xf32>, vector<8x192xf32> -> vector<8x192xf32>
    %c0_43 = arith.constant 0 : index
    %c0_44 = arith.constant 0 : index
    %81 = vector.load %arg12[%c0_43, %c0_44] : memref<1x192xf32, #tpu.memory_space<vmem>>, vector<1x192xf32>
    %82 = vector.broadcast %81 : vector<1x192xf32> to vector<8x192xf32>
    %83 = arith.addf %80, %82 : vector<8x192xf32>
    %c0_45 = arith.constant 0 : index
    %c0_46 = arith.constant 0 : index
    %84 = vector.load %arg13[%c0_45, %c0_46] : memref<16x48xf32, #tpu.memory_space<vmem>>, vector<16x48xf32>
    %c0_47 = arith.constant 0 : index
    %c0_48 = arith.constant 0 : index
    %85 = vector.load %arg14[%c0_47, %c0_48] : memref<1x16xf32, #tpu.memory_space<vmem>>, vector<1x16xf32>
    %cst_49 = arith.constant 0.000000e+00 : f32
    %86 = vector.broadcast %cst_49 : f32 to vector<8x16xf32>
    %87 = vector.extract_strided_slice %83 {offsets = [0, 0], sizes = [8, 48], strides = [1, 1]} : vector<8x192xf32> to vector<8x48xf32>
    %cst_50 = arith.constant dense<0.000000e+00> : vector<8x48xf32>
    %88 = tpu.matmul %86, %84, %cst_50 {dimension_numbers = #tpu.dot_dimension_numbers<[1], [0], [0], [1], [0, 0, 1, 1], [], []>} : vector<8x16xf32>, vector<16x48xf32>, vector<8x48xf32> -> vector<8x48xf32>
    %89 = vector.extract_strided_slice %87 {offsets = [0, 0], sizes = [8, 16], strides = [1, 1]} : vector<8x48xf32> to vector<8x16xf32>
    %90 = vector.extract_strided_slice %88 {offsets = [0, 0], sizes = [8, 16], strides = [1, 1]} : vector<8x48xf32> to vector<8x16xf32>
    %91 = arith.addf %89, %90 : vector<8x16xf32>
    %92 = arith.negf %91 : vector<8x16xf32>
    %93 = math.exp %92 : vector<8x16xf32>
    %cst_51 = arith.constant 1.000000e+00 : f32
    %94 = vector.broadcast %cst_51 : f32 to vector<8x16xf32>
    %95 = arith.addf %94, %93 : vector<8x16xf32>
    %96 = arith.divf %94, %95 : vector<8x16xf32>
    %97 = vector.extract_strided_slice %87 {offsets = [0, 16], sizes = [8, 16], strides = [1, 1]} : vector<8x48xf32> to vector<8x16xf32>
    %98 = vector.extract_strided_slice %88 {offsets = [0, 16], sizes = [8, 16], strides = [1, 1]} : vector<8x48xf32> to vector<8x16xf32>
    %99 = arith.addf %97, %98 : vector<8x16xf32>
    %100 = arith.negf %99 : vector<8x16xf32>
    %101 = math.exp %100 : vector<8x16xf32>
    %cst_52 = arith.constant 1.000000e+00 : f32
    %102 = vector.broadcast %cst_52 : f32 to vector<8x16xf32>
    %103 = arith.addf %102, %101 : vector<8x16xf32>
    %104 = arith.divf %102, %103 : vector<8x16xf32>
    %105 = vector.extract_strided_slice %87 {offsets = [0, 32], sizes = [8, 16], strides = [1, 1]} : vector<8x48xf32> to vector<8x16xf32>
    %106 = vector.extract_strided_slice %88 {offsets = [0, 32], sizes = [8, 16], strides = [1, 1]} : vector<8x48xf32> to vector<8x16xf32>
    %107 = vector.broadcast %85 : vector<1x16xf32> to vector<8x16xf32>
    %108 = arith.addf %106, %107 : vector<8x16xf32>
    %109 = arith.mulf %96, %108 : vector<8x16xf32>
    %110 = arith.addf %105, %109 : vector<8x16xf32>
    %111 = math.tanh %110 : vector<8x16xf32>
    %cst_53 = arith.constant 1.000000e+00 : f32
    %112 = vector.broadcast %cst_53 : f32 to vector<8x16xf32>
    %113 = arith.subf %112, %104 : vector<8x16xf32>
    %114 = arith.mulf %113, %111 : vector<8x16xf32>
    %115 = arith.mulf %104, %86 : vector<8x16xf32>
    %116 = arith.addf %114, %115 : vector<8x16xf32>
    %117 = vector.extract_strided_slice %83 {offsets = [0, 48], sizes = [8, 48], strides = [1, 1]} : vector<8x192xf32> to vector<8x48xf32>
    %cst_54 = arith.constant dense<0.000000e+00> : vector<8x48xf32>
    %118 = tpu.matmul %116, %84, %cst_54 {dimension_numbers = #tpu.dot_dimension_numbers<[1], [0], [0], [1], [0, 0, 1, 1], [], []>} : vector<8x16xf32>, vector<16x48xf32>, vector<8x48xf32> -> vector<8x48xf32>
    %119 = vector.extract_strided_slice %117 {offsets = [0, 0], sizes = [8, 16], strides = [1, 1]} : vector<8x48xf32> to vector<8x16xf32>
    %120 = vector.extract_strided_slice %118 {offsets = [0, 0], sizes = [8, 16], strides = [1, 1]} : vector<8x48xf32> to vector<8x16xf32>
    %121 = arith.addf %119, %120 : vector<8x16xf32>
    %122 = arith.negf %121 : vector<8x16xf32>
    %123 = math.exp %122 : vector<8x16xf32>
    %cst_55 = arith.constant 1.000000e+00 : f32
    %124 = vector.broadcast %cst_55 : f32 to vector<8x16xf32>
    %125 = arith.addf %124, %123 : vector<8x16xf32>
    %126 = arith.divf %124, %125 : vector<8x16xf32>
    %127 = vector.extract_strided_slice %117 {offsets = [0, 16], sizes = [8, 16], strides = [1, 1]} : vector<8x48xf32> to vector<8x16xf32>
    %128 = vector.extract_strided_slice %118 {offsets = [0, 16], sizes = [8, 16], strides = [1, 1]} : vector<8x48xf32> to vector<8x16xf32>
    %129 = arith.addf %127, %128 : vector<8x16xf32>
    %130 = arith.negf %129 : vector<8x16xf32>
    %131 = math.exp %130 : vector<8x16xf32>
    %cst_56 = arith.constant 1.000000e+00 : f32
    %132 = vector.broadcast %cst_56 : f32 to vector<8x16xf32>
    %133 = arith.addf %132, %131 : vector<8x16xf32>
    %134 = arith.divf %132, %133 : vector<8x16xf32>
    %135 = vector.extract_strided_slice %117 {offsets = [0, 32], sizes = [8, 16], strides = [1, 1]} : vector<8x48xf32> to vector<8x16xf32>
    %136 = vector.extract_strided_slice %118 {offsets = [0, 32], sizes = [8, 16], strides = [1, 1]} : vector<8x48xf32> to vector<8x16xf32>
    %137 = vector.broadcast %85 : vector<1x16xf32> to vector<8x16xf32>
    %138 = arith.addf %136, %137 : vector<8x16xf32>
    %139 = arith.mulf %126, %138 : vector<8x16xf32>
    %140 = arith.addf %135, %139 : vector<8x16xf32>
    %141 = math.tanh %140 : vector<8x16xf32>
    %cst_57 = arith.constant 1.000000e+00 : f32
    %142 = vector.broadcast %cst_57 : f32 to vector<8x16xf32>
    %143 = arith.subf %142, %134 : vector<8x16xf32>
    %144 = arith.mulf %143, %141 : vector<8x16xf32>
    %145 = arith.mulf %134, %116 : vector<8x16xf32>
    %146 = arith.addf %144, %145 : vector<8x16xf32>
    %147 = vector.extract_strided_slice %83 {offsets = [0, 96], sizes = [8, 48], strides = [1, 1]} : vector<8x192xf32> to vector<8x48xf32>
    %cst_58 = arith.constant dense<0.000000e+00> : vector<8x48xf32>
    %148 = tpu.matmul %146, %84, %cst_58 {dimension_numbers = #tpu.dot_dimension_numbers<[1], [0], [0], [1], [0, 0, 1, 1], [], []>} : vector<8x16xf32>, vector<16x48xf32>, vector<8x48xf32> -> vector<8x48xf32>
    %149 = vector.extract_strided_slice %147 {offsets = [0, 0], sizes = [8, 16], strides = [1, 1]} : vector<8x48xf32> to vector<8x16xf32>
    %150 = vector.extract_strided_slice %148 {offsets = [0, 0], sizes = [8, 16], strides = [1, 1]} : vector<8x48xf32> to vector<8x16xf32>
    %151 = arith.addf %149, %150 : vector<8x16xf32>
    %152 = arith.negf %151 : vector<8x16xf32>
    %153 = math.exp %152 : vector<8x16xf32>
    %cst_59 = arith.constant 1.000000e+00 : f32
    %154 = vector.broadcast %cst_59 : f32 to vector<8x16xf32>
    %155 = arith.addf %154, %153 : vector<8x16xf32>
    %156 = arith.divf %154, %155 : vector<8x16xf32>
    %157 = vector.extract_strided_slice %147 {offsets = [0, 16], sizes = [8, 16], strides = [1, 1]} : vector<8x48xf32> to vector<8x16xf32>
    %158 = vector.extract_strided_slice %148 {offsets = [0, 16], sizes = [8, 16], strides = [1, 1]} : vector<8x48xf32> to vector<8x16xf32>
    %159 = arith.addf %157, %158 : vector<8x16xf32>
    %160 = arith.negf %159 : vector<8x16xf32>
    %161 = math.exp %160 : vector<8x16xf32>
    %cst_60 = arith.constant 1.000000e+00 : f32
    %162 = vector.broadcast %cst_60 : f32 to vector<8x16xf32>
    %163 = arith.addf %162, %161 : vector<8x16xf32>
    %164 = arith.divf %162, %163 : vector<8x16xf32>
    %165 = vector.extract_strided_slice %147 {offsets = [0, 32], sizes = [8, 16], strides = [1, 1]} : vector<8x48xf32> to vector<8x16xf32>
    %166 = vector.extract_strided_slice %148 {offsets = [0, 32], sizes = [8, 16], strides = [1, 1]} : vector<8x48xf32> to vector<8x16xf32>
    %167 = vector.broadcast %85 : vector<1x16xf32> to vector<8x16xf32>
    %168 = arith.addf %166, %167 : vector<8x16xf32>
    %169 = arith.mulf %156, %168 : vector<8x16xf32>
    %170 = arith.addf %165, %169 : vector<8x16xf32>
    %171 = math.tanh %170 : vector<8x16xf32>
    %cst_61 = arith.constant 1.000000e+00 : f32
    %172 = vector.broadcast %cst_61 : f32 to vector<8x16xf32>
    %173 = arith.subf %172, %164 : vector<8x16xf32>
    %174 = arith.mulf %173, %171 : vector<8x16xf32>
    %175 = arith.mulf %164, %146 : vector<8x16xf32>
    %176 = arith.addf %174, %175 : vector<8x16xf32>
    %177 = vector.extract_strided_slice %83 {offsets = [0, 144], sizes = [8, 48], strides = [1, 1]} : vector<8x192xf32> to vector<8x48xf32>
    %cst_62 = arith.constant dense<0.000000e+00> : vector<8x48xf32>
    %178 = tpu.matmul %176, %84, %cst_62 {dimension_numbers = #tpu.dot_dimension_numbers<[1], [0], [0], [1], [0, 0, 1, 1], [], []>} : vector<8x16xf32>, vector<16x48xf32>, vector<8x48xf32> -> vector<8x48xf32>
    %179 = vector.extract_strided_slice %177 {offsets = [0, 0], sizes = [8, 16], strides = [1, 1]} : vector<8x48xf32> to vector<8x16xf32>
    %180 = vector.extract_strided_slice %178 {offsets = [0, 0], sizes = [8, 16], strides = [1, 1]} : vector<8x48xf32> to vector<8x16xf32>
    %181 = arith.addf %179, %180 : vector<8x16xf32>
    %182 = arith.negf %181 : vector<8x16xf32>
    %183 = math.exp %182 : vector<8x16xf32>
    %cst_63 = arith.constant 1.000000e+00 : f32
    %184 = vector.broadcast %cst_63 : f32 to vector<8x16xf32>
    %185 = arith.addf %184, %183 : vector<8x16xf32>
    %186 = arith.divf %184, %185 : vector<8x16xf32>
    %187 = vector.extract_strided_slice %177 {offsets = [0, 16], sizes = [8, 16], strides = [1, 1]} : vector<8x48xf32> to vector<8x16xf32>
    %188 = vector.extract_strided_slice %178 {offsets = [0, 16], sizes = [8, 16], strides = [1, 1]} : vector<8x48xf32> to vector<8x16xf32>
    %189 = arith.addf %187, %188 : vector<8x16xf32>
    %190 = arith.negf %189 : vector<8x16xf32>
    %191 = math.exp %190 : vector<8x16xf32>
    %cst_64 = arith.constant 1.000000e+00 : f32
    %192 = vector.broadcast %cst_64 : f32 to vector<8x16xf32>
    %193 = arith.addf %192, %191 : vector<8x16xf32>
    %194 = arith.divf %192, %193 : vector<8x16xf32>
    %195 = vector.extract_strided_slice %177 {offsets = [0, 32], sizes = [8, 16], strides = [1, 1]} : vector<8x48xf32> to vector<8x16xf32>
    %196 = vector.extract_strided_slice %178 {offsets = [0, 32], sizes = [8, 16], strides = [1, 1]} : vector<8x48xf32> to vector<8x16xf32>
    %197 = vector.broadcast %85 : vector<1x16xf32> to vector<8x16xf32>
    %198 = arith.addf %196, %197 : vector<8x16xf32>
    %199 = arith.mulf %186, %198 : vector<8x16xf32>
    %200 = arith.addf %195, %199 : vector<8x16xf32>
    %201 = math.tanh %200 : vector<8x16xf32>
    %cst_65 = arith.constant 1.000000e+00 : f32
    %202 = vector.broadcast %cst_65 : f32 to vector<8x16xf32>
    %203 = arith.subf %202, %194 : vector<8x16xf32>
    %204 = arith.mulf %203, %201 : vector<8x16xf32>
    %205 = arith.mulf %194, %176 : vector<8x16xf32>
    %206 = arith.addf %204, %205 : vector<8x16xf32>
    %c0_66 = arith.constant 0 : index
    %c0_67 = arith.constant 0 : index
    %207 = vector.load %arg15[%c0_66, %c0_67] : memref<8x16xf32, #tpu.memory_space<vmem>>, vector<8x16xf32>
    tpu.vector_store %arg15[%c0_66, %c0_67], %206 {strides = array<i32>} : memref<8x16xf32, #tpu.memory_space<vmem>>, vector<8x16xf32>,
    return
  }
}

</mosaic_0001>

<llo_original>
// kernel: _lambda_.1
$region0: #{_lambda_.1}
  #allocation0 [shape = 'u32[]', space=smem, size = 0x4, offset = 0x4, fixed_abs, tag = 'smem constant byte address 0x4 - core index']
  #allocation1 [shape = 'u32[144,128]{1,0:T(1,128)}', space=vmem, size = 0x12000, scoped, tag = 'internal scratch']
  %s0 = inlined_call_operand.vmem [shape: f32[8,256], index: 0, kind: input, shape index: {}]
  %s1 = inlined_call_operand.hbm [shape: f32[256,256], index: 1, kind: input, shape index: {}]
  %s2 = inlined_call_operand.hbm [shape: f32[256,4], index: 2, kind: input, shape index: {}]
  %s3 = inlined_call_operand.vmem [shape: f32[4,256], index: 3, kind: input, shape index: {}]
  %s4 = inlined_call_operand.vmem [shape: f32[1,4], index: 4, kind: input, shape index: {}]
  %s5 = inlined_call_operand.vmem [shape: f32[1,4], index: 5, kind: input, shape index: {}]
  %s6 = inlined_call_operand.hbm [shape: f32[256,128], index: 6, kind: input, shape index: {}]
  %s7 = inlined_call_operand.vmem [shape: f32[128,8], index: 7, kind: input, shape index: {}]
  %s8 = inlined_call_operand.vmem [shape: f32[8,128], index: 8, kind: input, shape index: {}]
  %s9 = inlined_call_operand.vmem [shape: f32[1,8], index: 9, kind: input, shape index: {}]
  %s10 = inlined_call_operand.vmem [shape: f32[1,8], index: 10, kind: input, shape index: {}]
  %s11 = inlined_call_operand.hbm [shape: f32[128,192], index: 11, kind: input, shape index: {}]
  %s12 = inlined_call_operand.vmem [shape: f32[1,192], index: 12, kind: input, shape index: {}]
  %s13 = inlined_call_operand.vmem [shape: f32[16,48], index: 13, kind: input, shape index: {}]
  %s14 = inlined_call_operand.vmem [shape: f32[1,16], index: 14, kind: input, shape index: {}]
  %s15 = inlined_call_operand.hbm [shape: f32[8,16], index: 15, kind: output, shape index: {}]
  %s16 = sld [smem:[#allocation0]]
  $region86: #{_lambda_.1} parent=0
    _
  %s18 = ssub.s32 1, %s16
  %s19 = scalar_select 0, %s18, %s16
  $region1: #{_lambda_.1} parent=0
    #allocation2 [shape = 'u8[262144]{0}', space=vmem, size = 0x40000, scoped, tag = 'input window, operand 1, single buffered']
    #allocation3 [shape = 's32[1]{0}', space=sflag, size = 0x4, scoped, tag = 'scoped memory for _lambda_.1']
    #allocation4 [shape = 's32[1]{0}', space=sflag, size = 0x4, scoped, tag = 'scoped memory for _lambda_.1']
    #allocation5 [shape = 'u8[131072]{0}', space=vmem, size = 0x20000, scoped, tag = 'input window, operand 2, single buffered']
    #allocation6 [shape = 's32[1]{0}', space=sflag, size = 0x4, scoped, tag = 'scoped memory for _lambda_.1']
    #allocation7 [shape = 'u8[131072]{0}', space=vmem, size = 0x20000, scoped, tag = 'input window, operand 6, single buffered']
    #allocation8 [shape = 'u8[131072]{0}', space=vmem, size = 0x20000, scoped, tag = 'input window, operand 11, single buffered']
    #allocation9 [shape = 's32[1]{0}', space=sflag, size = 0x4, scoped, tag = 'scoped memory for _lambda_.1']
    #allocation10 [shape = 'u8[4096]{0}', space=vmem, size = 0x1000, scoped, tag = 'output window, operand 0, single buffered']
    %20 = vsyncpa [#allocation3], 0
    %21 = vsyncpa [#allocation6], 0
    %22 = vsyncpa [#allocation9], 0
    %23 = vsyncpa [#allocation4], 0
    // Predicated region
    $region2: #{_lambda_.1} parent=1 // pred_check
      _
    $region3: #{_lambda_.1} parent=1 // pred_check_branch
      %25 = sbr.rel (0) target = $region5
    $region4: #{_lambda_.1} parent=1 // pred_region
      _
    $region5: #{_lambda_.1} parent=1 // pred_fallthru
      _
    // Predicated region
    $region6: #{_lambda_.1} parent=1 // pred_check
      _
    $region7: #{_lambda_.1} parent=1 // pred_check_branch
      %27 = sbr.rel (0) target = $region9
    $region8: #{_lambda_.1} parent=1 // pred_region
      %s29 = ssub.s32 8192, 8192
      %30 = vsyncadd [#allocation3], %s29
      %s31 = sshll.u32 [#allocation2], 4
      %s32 = int_to_ptr.vmem [resolvable:$true] %s31
      %37 = dma.hbm_to_vmem [thread:$0]  %s1, 8192, %s32, [#allocation3], 256, 256, 16
    $region9: #{_lambda_.1} parent=1 // pred_fallthru
      _
    // Predicated region
    $region10: #{_lambda_.1} parent=1 // pred_check
      _
    $region11: #{_lambda_.1} parent=1 // pred_check_branch
      %39 = sbr.rel (0) target = $region13
    $region12: #{_lambda_.1} parent=1 // pred_region
      %s41 = ssub.s32 4096, 4096
      %42 = vsyncadd [#allocation6], %s41
      %s43 = sshll.u32 [#allocation5], 4
      %s44 = int_to_ptr.vmem [resolvable:$true] %s43
      %49 = dma.hbm_to_vmem [thread:$0]  %s2, 4096, %s44, [#allocation6], 128, 128, 8
    $region13: #{_lambda_.1} parent=1 // pred_fallthru
      _
    // Predicated region
    $region14: #{_lambda_.1} parent=1 // pred_check
      _
    $region15: #{_lambda_.1} parent=1 // pred_check_branch
      %51 = sbr.rel (0) target = $region17
    $region16: #{_lambda_.1} parent=1 // pred_region
      _
    $region17: #{_lambda_.1} parent=1 // pred_fallthru
      _
    // Predicated region
    $region18: #{_lambda_.1} parent=1 // pred_check
      _
    $region19: #{_lambda_.1} parent=1 // pred_check_branch
      %53 = sbr.rel (0) target = $region21
    $region20: #{_lambda_.1} parent=1 // pred_region
      _
    $region21: #{_lambda_.1} parent=1 // pred_fallthru
      _
    // Predicated region
    $region22: #{_lambda_.1} parent=1 // pred_check
      _
    $region23: #{_lambda_.1} parent=1 // pred_check_branch
      %55 = sbr.rel (0) target = $region25
    $region24: #{_lambda_.1} parent=1 // pred_region
      _
    $region25: #{_lambda_.1} parent=1 // pred_fallthru
      _
    // Predicated region
    $region26: #{_lambda_.1} parent=1 // pred_check
      _
    $region27: #{_lambda_.1} parent=1 // pred_check_branch
      %57 = sbr.rel (0) target = $region29
    $region28: #{_lambda_.1} parent=1 // pred_region
      %s59 = ssub.s32 4096, 4096
      %60 = vsyncadd [#allocation6], %s59
      %s61 = sshll.u32 [#allocation7], 4
      %s62 = int_to_ptr.vmem [resolvable:$true] %s61
      %67 = dma.hbm_to_vmem [thread:$0]  %s6, 4096, %s62, [#allocation6], 128, 128, 8
    $region29: #{_lambda_.1} parent=1 // pred_fallthru
      _
    // Predicated region
    $region30: #{_lambda_.1} parent=1 // pred_check
      _
    $region31: #{_lambda_.1} parent=1 // pred_check_branch
      %69 = sbr.rel (0) target = $region33
    $region32: #{_lambda_.1} parent=1 // pred_region
      _
    $region33: #{_lambda_.1} parent=1 // pred_fallthru
      _
    // Predicated region
    $region34: #{_lambda_.1} parent=1 // pred_check
      _
    $region35: #{_lambda_.1} parent=1 // pred_check_branch
      %71 = sbr.rel (0) target = $region37
    $region36: #{_lambda_.1} parent=1 // pred_region
      _
    $region37: #{_lambda_.1} parent=1 // pred_fallthru
      _
    // Predicated region
    $region38: #{_lambda_.1} parent=1 // pred_check
      _
    $region39: #{_lambda_.1} parent=1 // pred_check_branch
      %73 = sbr.rel (0) target = $region41
    $region40: #{_lambda_.1} parent=1 // pred_region
      _
    $region41: #{_lambda_.1} parent=1 // pred_fallthru
      _
    // Predicated region
    $region42: #{_lambda_.1} parent=1 // pred_check
      _
    $region43: #{_lambda_.1} parent=1 // pred_check_branch
      %75 = sbr.rel (0) target = $region45
    $region44: #{_lambda_.1} parent=1 // pred_region
      _
    $region45: #{_lambda_.1} parent=1 // pred_fallthru
      _
    // Predicated region
    $region46: #{_lambda_.1} parent=1 // pred_check
      _
    $region47: #{_lambda_.1} parent=1 // pred_check_branch
      %77 = sbr.rel (0) target = $region49
    $region48: #{_lambda_.1} parent=1 // pred_region
      %s79 = ssub.s32 4096, 4096
      %80 = vsyncadd [#allocation9], %s79
      %s81 = sshll.u32 [#allocation8], 4
      %s82 = int_to_ptr.vmem [resolvable:$true] %s81
      %87 = dma.hbm_to_vmem [thread:$0]  %s11, 4096, %s82, [#allocation9], 256, 256, 16
    $region49: #{_lambda_.1} parent=1 // pred_fallthru
      _
    // Predicated region
    $region50: #{_lambda_.1} parent=1 // pred_check
      _
    $region51: #{_lambda_.1} parent=1 // pred_check_branch
      %89 = sbr.rel (0) target = $region53
    $region52: #{_lambda_.1} parent=1 // pred_region
      _
    $region53: #{_lambda_.1} parent=1 // pred_fallthru
      _
    // Predicated region
    $region54: #{_lambda_.1} parent=1 // pred_check
      _
    $region55: #{_lambda_.1} parent=1 // pred_check_branch
      %91 = sbr.rel (0) target = $region57
    $region56: #{_lambda_.1} parent=1 // pred_region
      _
    $region57: #{_lambda_.1} parent=1 // pred_fallthru
      _
    // Predicated region
    $region58: #{_lambda_.1} parent=1 // pred_check
      _
    $region59: #{_lambda_.1} parent=1 // pred_check_branch
      %93 = sbr.rel (0) target = $region61
    $region60: #{_lambda_.1} parent=1 // pred_region
      _
    $region61: #{_lambda_.1} parent=1 // pred_fallthru
      _
    // Predicated region
    $region62: #{_lambda_.1} parent=1 // pred_check
      _
    $region63: #{_lambda_.1} parent=1 // pred_check_branch
      %95 = sbr.rel (0) target = $region65
    $region64: #{_lambda_.1} parent=1 // pred_region
      %96 = dma.done [#allocation3], 8192
    $region65: #{_lambda_.1} parent=1 // pred_fallthru
      _
    // Predicated region
    $region66: #{_lambda_.1} parent=1 // pred_check
      _
    $region67: #{_lambda_.1} parent=1 // pred_check_branch
      %98 = sbr.rel (0) target = $region69
    $region68: #{_lambda_.1} parent=1 // pred_region
      %99 = dma.done [#allocation6], 4096
    $region69: #{_lambda_.1} parent=1 // pred_fallthru
      _
    // Predicated region
    $region70: #{_lambda_.1} parent=1 // pred_check
      _
    $region71: #{_lambda_.1} parent=1 // pred_check_branch
      %101 = sbr.rel (0) target = $region73
    $region72: #{_lambda_.1} parent=1 // pred_region
      %102 = dma.done [#allocation6], 4096
    $region73: #{_lambda_.1} parent=1 // pred_fallthru
      _
    // Predicated region
    $region74: #{_lambda_.1} parent=1 // pred_check
      _
    $region75: #{_lambda_.1} parent=1 // pred_check_branch
      %104 = sbr.rel (0) target = $region77
    $region76: #{_lambda_.1} parent=1 // pred_region
      %105 = dma.done [#allocation9], 4096
    $region77: #{_lambda_.1} parent=1 // pred_fallthru
      _
    %v106 = vld [vmem:[%s0] sm:$0xff]
    %v107 = vld [vmem:[%s0 + $0x8] sm:$0xff]
    %v108 = vld [vmem:[#allocation2] sm:$0xff]
    %v109 = vld [vmem:[#allocation2 + $0x8] sm:$0xff]
    %v110 = vld [vmem:[#allocation2 + $0x10] sm:$0xff]
    %v111 = vld [vmem:[#allocation2 + $0x18] sm:$0xff]
    %v112 = vld [vmem:[#allocation2 + $0x20] sm:$0xff]
    %v113 = vld [vmem:[#allocation2 + $0x28] sm:$0xff]
    %v114 = vld [vmem:[#allocation2 + $0x30] sm:$0xff]
    %v115 = vld [vmem:[#allocation2 + $0x38] sm:$0xff]
    %v116 = vld [vmem:[#allocation2 + $0x40] sm:$0xff]
    %v117 = vld [vmem:[#allocation2 + $0x48] sm:$0xff]
    %v118 = vld [vmem:[#allocation2 + $0x50] sm:$0xff]
    %v119 = vld [vmem:[#allocation2 + $0x58] sm:$0xff]
    %v120 = vld [vmem:[#allocation2 + $0x60] sm:$0xff]
    %v121 = vld [vmem:[#allocation2 + $0x68] sm:$0xff]
    %v122 = vld [vmem:[#allocation2 + $0x70] sm:$0xff]
    %v123 = vld [vmem:[#allocation2 + $0x78] sm:$0xff]
    %v124 = vld [vmem:[#allocation2 + $0x80] sm:$0xff]
    %v125 = vld [vmem:[#allocation2 + $0x88] sm:$0xff]
    %v126 = vld [vmem:[#allocation2 + $0x90] sm:$0xff]
    %v127 = vld [vmem:[#allocation2 + $0x98] sm:$0xff]
    %v128 = vld [vmem:[#allocation2 + $0xa0] sm:$0xff]
    %v129 = vld [vmem:[#allocation2 + $0xa8] sm:$0xff]
    %v130 = vld [vmem:[#allocation2 + $0xb0] sm:$0xff]
    %v131 = vld [vmem:[#allocation2 + $0xb8] sm:$0xff]
    %v132 = vld [vmem:[#allocation2 + $0xc0] sm:$0xff]
    %v133 = vld [vmem:[#allocation2 + $0xc8] sm:$0xff]
    %v134 = vld [vmem:[#allocation2 + $0xd0] sm:$0xff]
    %v135 = vld [vmem:[#allocation2 + $0xd8] sm:$0xff]
    %v136 = vld [vmem:[#allocation2 + $0xe0] sm:$0xff]
    %v137 = vld [vmem:[#allocation2 + $0xe8] sm:$0xff]
    %v138 = vld [vmem:[#allocation2 + $0xf0] sm:$0xff]
    %v139 = vld [vmem:[#allocation2 + $0xf8] sm:$0xff]
    %v140 = vld [vmem:[#allocation2 + $0x100] sm:$0xff]
    %v141 = vld [vmem:[#allocation2 + $0x108] sm:$0xff]
    %v142 = vld [vmem:[#allocation2 + $0x110] sm:$0xff]
    %v143 = vld [vmem:[#allocation2 + $0x118] sm:$0xff]
    %v144 = vld [vmem:[#allocation2 + $0x120] sm:$0xff]
    %v145 = vld [vmem:[#allocation2 + $0x128] sm:$0xff]
    %v146 = vld [vmem:[#allocation2 + $0x130] sm:$0xff]
    %v147 = vld [vmem:[#allocation2 + $0x138] sm:$0xff]
    %v148 = vld [vmem:[#allocation2 + $0x140] sm:$0xff]
    %v149 = vld [vmem:[#allocation2 + $0x148] sm:$0xff]
    %v150 = vld [vmem:[#allocation2 + $0x150] sm:$0xff]
    %v151 = vld [vmem:[#allocation2 + $0x158] sm:$0xff]
    %v152 = vld [vmem:[#allocation2 + $0x160] sm:$0xff]
    %v153 = vld [vmem:[#allocation2 + $0x168] sm:$0xff]
    %v154 = vld [vmem:[#allocation2 + $0x170] sm:$0xff]
    %v155 = vld [vmem:[#allocation2 + $0x178] sm:$0xff]
    %v156 = vld [vmem:[#allocation2 + $0x180] sm:$0xff]
    %v157 = vld [vmem:[#allocation2 + $0x188] sm:$0xff]
    %v158 = vld [vmem:[#allocation2 + $0x190] sm:$0xff]
    %v159 = vld [vmem:[#allocation2 + $0x198] sm:$0xff]
    %v160 = vld [vmem:[#allocation2 + $0x1a0] sm:$0xff]
    %v161 = vld [vmem:[#allocation2 + $0x1a8] sm:$0xff]
    %v162 = vld [vmem:[#allocation2 + $0x1b0] sm:$0xff]
    %v163 = vld [vmem:[#allocation2 + $0x1b8] sm:$0xff]
    %v164 = vld [vmem:[#allocation2 + $0x1c0] sm:$0xff]
    %v165 = vld [vmem:[#allocation2 + $0x1c8] sm:$0xff]
    %v166 = vld [vmem:[#allocation2 + $0x1d0] sm:$0xff]
    %v167 = vld [vmem:[#allocation2 + $0x1d8] sm:$0xff]
    %v168 = vld [vmem:[#allocation2 + $0x1e0] sm:$0xff]
    %v169 = vld [vmem:[#allocation2 + $0x1e8] sm:$0xff]
    %v170 = vld [vmem:[#allocation2 + $0x1f0] sm:$0xff]
    %v171 = vld [vmem:[#allocation2 + $0x1f8] sm:$0xff]
    %172 = vmatprep.subr.mxu0 %v109
    %173 = vmatpush1.msra.mxu0 %v108
    %174 = vmatprep.subr.mxu0 %v111
    %175 = vmatpush1.msra.mxu0 %v110
    %176 = vmatprep.subr.mxu0 %v113
    %177 = vmatpush1.msra.mxu0 %v112
    %178 = vmatprep.subr.mxu0 %v115
    %179 = vmatpush1.msra.mxu0 %v114
    %180 = vmatprep.subr.mxu0 %v117
    %181 = vmatpush1.msra.mxu0 %v116
    %182 = vmatprep.subr.mxu0 %v119
    %183 = vmatpush1.msra.mxu0 %v118
    %184 = vmatprep.subr.mxu0 %v121
    %185 = vmatpush1.msra.mxu0 %v120
    %186 = vmatprep.subr.mxu0 %v123
    %187 = vmatpush1.msra.mxu0 %v122
    %188 = vmatprep.subr.mxu0 %v125
    %189 = vmatpush1.msra.mxu0 %v124
    %190 = vmatprep.subr.mxu0 %v127
    %191 = vmatpush1.msra.mxu0 %v126
    %192 = vmatprep.subr.mxu0 %v129
    %193 = vmatpush1.msra.mxu0 %v128
    %194 = vmatprep.subr.mxu0 %v131
    %195 = vmatpush1.msra.mxu0 %v130
    %196 = vmatprep.subr.mxu0 %v133
    %197 = vmatpush1.msra.mxu0 %v132
    %198 = vmatprep.subr.mxu0 %v135
    %199 = vmatpush1.msra.mxu0 %v134
    %200 = vmatprep.subr.mxu0 %v137
    %201 = vmatpush1.msra.mxu0 %v136
    %202 = vmatprep.subr.mxu0 %v139
    %203 = vmatpush1.msra.mxu0 %v138
    %204 = vmatprep.subr.mxu0 %v141
    %205 = vmatpush1.msra.mxu0 %v140
    %206 = vmatprep.subr.mxu0 %v143
    %207 = vmatpush1.msra.mxu0 %v142
    %208 = vmatprep.subr.mxu0 %v145
    %209 = vmatpush1.msra.mxu0 %v144
    %210 = vmatprep.subr.mxu0 %v147
    %211 = vmatpush1.msra.mxu0 %v146
    %212 = vmatprep.subr.mxu0 %v149
    %213 = vmatpush1.msra.mxu0 %v148
    %214 = vmatprep.subr.mxu0 %v151
    %215 = vmatpush1.msra.mxu0 %v150
    %216 = vmatprep.subr.mxu0 %v153
    %217 = vmatpush1.msra.mxu0 %v152
    %218 = vmatprep.subr.mxu0 %v155
    %219 = vmatpush1.msra.mxu0 %v154
    %220 = vmatprep.subr.mxu0 %v157
    %221 = vmatpush1.msra.mxu0 %v156
    %222 = vmatprep.subr.mxu0 %v159
    %223 = vmatpush1.msra.mxu0 %v158
    %224 = vmatprep.subr.mxu0 %v161
    %225 = vmatpush1.msra.mxu0 %v160
    %226 = vmatprep.subr.mxu0 %v163
    %227 = vmatpush1.msra.mxu0 %v162
    %228 = vmatprep.subr.mxu0 %v165
    %229 = vmatpush1.msra.mxu0 %v164
    %230 = vmatprep.subr.mxu0 %v167
    %231 = vmatpush1.msra.mxu0 %v166
    %232 = vmatprep.subr.mxu0 %v169
    %233 = vmatpush1.msra.mxu0 %v168
    %234 = vmatprep.subr.mxu0 %v171
    %235 = vmatpush1.msra.mxu0 %v170
    %236 = vmatprep.mubr.f32.mxu0 %v107
    %237 = vmatmul.mubr.f32.gmra.mrb[0].mxu0 %v106
    %v238 = vpop.f32.mrb[0].mxu0
    %v239 = vadd.f32 0.0, %v238
    %v240 = vpop.f32.mrb[0].mxu0
    %v241 = vadd.f32 0.0, %v240
    %242 = vdwg.mxu0
    %v243 = vrot.slane %v239, 4
    %v244 = vadd.f32 %v239, %v243
    %v245 = vrot.slane %v244, 2
    %v246 = vadd.f32 %v244, %v245
    %v247 = vrot.slane %v246, 1
    %v248 = vadd.f32 %v246, %v247
    %v249 = vrot.slane %v241, 4
    %v250 = vadd.f32 %v241, %v249
    %v251 = vrot.slane %v250, 2
    %v252 = vadd.f32 %v250, %v251
    %v253 = vrot.slane %v252, 1
    %v254 = vadd.f32 %v252, %v253
    %v255 = vmul.f32 %v239, %v239
    %v256 = vmul.f32 %v241, %v241
    %v257 = vrot.slane %v255, 4
    %v258 = vadd.f32 %v255, %v257
    %v259 = vrot.slane %v258, 2
    %v260 = vadd.f32 %v258, %v259
    %v261 = vrot.slane %v260, 1
    %v262 = vadd.f32 %v260, %v261
    %v263 = vrot.slane %v256, 4
    %v264 = vadd.f32 %v256, %v263
    %v265 = vrot.slane %v264, 2
    %v266 = vadd.f32 %v264, %v265
    %v267 = vrot.slane %v266, 1
    %v268 = vadd.f32 %v266, %v267
    %vm269 = vcmask 1040384
    %v270 = vsel %vm269, %v248, %v262
    %v271 = vsel %vm269, %v254, %v268
    %v272 = vld [vmem:[#allocation5] sm:$0xff]
    %v273 = vld [vmem:[#allocation5 + $0x8] sm:$0xff]
    %v274 = vld [vmem:[#allocation5 + $0x10] sm:$0xff]
    %v275 = vld [vmem:[#allocation5 + $0x18] sm:$0xff]
    %v276 = vld [vmem:[#allocation5 + $0x20] sm:$0xff]
    %v277 = vld [vmem:[#allocation5 + $0x28] sm:$0xff]
    %v278 = vld [vmem:[#allocation5 + $0x30] sm:$0xff]
    %v279 = vld [vmem:[#allocation5 + $0x38] sm:$0xff]
    %v280 = vld [vmem:[#allocation5 + $0x40] sm:$0xff]
    %v281 = vld [vmem:[#allocation5 + $0x48] sm:$0xff]
    %v282 = vld [vmem:[#allocation5 + $0x50] sm:$0xff]
    %v283 = vld [vmem:[#allocation5 + $0x58] sm:$0xff]
    %v284 = vld [vmem:[#allocation5 + $0x60] sm:$0xff]
    %v285 = vld [vmem:[#allocation5 + $0x68] sm:$0xff]
    %v286 = vld [vmem:[#allocation5 + $0x70] sm:$0xff]
    %v287 = vld [vmem:[#allocation5 + $0x78] sm:$0xff]
    %v288 = vld [vmem:[#allocation5 + $0x80] sm:$0xff]
    %v289 = vld [vmem:[#allocation5 + $0x88] sm:$0xff]
    %v290 = vld [vmem:[#allocation5 + $0x90] sm:$0xff]
    %v291 = vld [vmem:[#allocation5 + $0x98] sm:$0xff]
    %v292 = vld [vmem:[#allocation5 + $0xa0] sm:$0xff]
    %v293 = vld [vmem:[#allocation5 + $0xa8] sm:$0xff]
    %v294 = vld [vmem:[#allocation5 + $0xb0] sm:$0xff]
    %v295 = vld [vmem:[#allocation5 + $0xb8] sm:$0xff]
    %v296 = vld [vmem:[#allocation5 + $0xc0] sm:$0xff]
    %v297 = vld [vmem:[#allocation5 + $0xc8] sm:$0xff]
    %v298 = vld [vmem:[#allocation5 + $0xd0] sm:$0xff]
    %v299 = vld [vmem:[#allocation5 + $0xd8] sm:$0xff]
    %v300 = vld [vmem:[#allocation5 + $0xe0] sm:$0xff]
    %v301 = vld [vmem:[#allocation5 + $0xe8] sm:$0xff]
    %v302 = vld [vmem:[#allocation5 + $0xf0] sm:$0xff]
    %v303 = vld [vmem:[#allocation5 + $0xf8] sm:$0xff]
    %304 = vmatprep.subr.mxu0 0.0
    %305 = vmatpush1.msra.mxu0 %v272
    %306 = vmatprep.subr.mxu0 0.0
    %307 = vmatpush1.msra.mxu0 %v273
    %308 = vmatprep.subr.mxu0 0.0
    %309 = vmatpush1.msra.mxu0 %v274
    %310 = vmatprep.subr.mxu0 0.0
    %311 = vmatpush1.msra.mxu0 %v275
    %312 = vmatprep.subr.mxu0 0.0
    %313 = vmatpush1.msra.mxu0 %v276
    %314 = vmatprep.subr.mxu0 0.0
    %315 = vmatpush1.msra.mxu0 %v277
    %316 = vmatprep.subr.mxu0 0.0
    %317 = vmatpush1.msra.mxu0 %v278
    %318 = vmatprep.subr.mxu0 0.0
    %319 = vmatpush1.msra.mxu0 %v279
    %320 = vmatprep.subr.mxu0 0.0
    %321 = vmatpush1.msra.mxu0 %v280
    %322 = vmatprep.subr.mxu0 0.0
    %323 = vmatpush1.msra.mxu0 %v281
    %324 = vmatprep.subr.mxu0 0.0
    %325 = vmatpush1.msra.mxu0 %v282
    %326 = vmatprep.subr.mxu0 0.0
    %327 = vmatpush1.msra.mxu0 %v283
    %328 = vmatprep.subr.mxu0 0.0
    %329 = vmatpush1.msra.mxu0 %v284
    %330 = vmatprep.subr.mxu0 0.0
    %331 = vmatpush1.msra.mxu0 %v285
    %332 = vmatprep.subr.mxu0 0.0
    %333 = vmatpush1.msra.mxu0 %v286
    %334 = vmatprep.subr.mxu0 0.0
    %335 = vmatpush1.msra.mxu0 %v287
    %336 = vmatprep.subr.mxu0 0.0
    %337 = vmatpush1.msra.mxu0 %v288
    %338 = vmatprep.subr.mxu0 0.0
    %339 = vmatpush1.msra.mxu0 %v289
    %340 = vmatprep.subr.mxu0 0.0
    %341 = vmatpush1.msra.mxu0 %v290
    %342 = vmatprep.subr.mxu0 0.0
    %343 = vmatpush1.msra.mxu0 %v291
    %344 = vmatprep.subr.mxu0 0.0
    %345 = vmatpush1.msra.mxu0 %v292
    %346 = vmatprep.subr.mxu0 0.0
    %347 = vmatpush1.msra.mxu0 %v293
    %348 = vmatprep.subr.mxu0 0.0
    %349 = vmatpush1.msra.mxu0 %v294
    %350 = vmatprep.subr.mxu0 0.0
    %351 = vmatpush1.msra.mxu0 %v295
    %352 = vmatprep.subr.mxu0 0.0
    %353 = vmatpush1.msra.mxu0 %v296
    %354 = vmatprep.subr.mxu0 0.0
    %355 = vmatpush1.msra.mxu0 %v297
    %356 = vmatprep.subr.mxu0 0.0
    %357 = vmatpush1.msra.mxu0 %v298
    %358 = vmatprep.subr.mxu0 0.0
    %359 = vmatpush1.msra.mxu0 %v299
    %360 = vmatprep.subr.mxu0 0.0
    %361 = vmatpush1.msra.mxu0 %v300
    %362 = vmatprep.subr.mxu0 0.0
    %363 = vmatpush1.msra.mxu0 %v301
    %364 = vmatprep.subr.mxu0 0.0
    %365 = vmatpush1.msra.mxu0 %v302
    %366 = vmatprep.subr.mxu0 0.0
    %367 = vmatpush1.msra.mxu0 %v303
    %368 = vmatprep.mubr.f32.mxu0 %v271
    %369 = vmatmul.mubr.f32.gmra.mrb[0].mxu0 %v270
    %v370 = vpop.f32.mrb[0].mxu0
    %v371 = vadd.f32 0.0, %v370
    %v372 = vpop.f32.mrb[0].mxu0
    %373 = vdwg.mxu0
    %v374 = vrcp.pop 512.0
    %v375 = vmul.f32 %v371, %v374
    %v376 = vmul.f32 %v375, %v375
    %v378 = vrot.slane %v376, 7
    %v380 = vsub.f32 %v375, %v378
    %v381 = vmax.f32 %v380, 0.0
    %v382 = vld [vmem:[%s4] sm:$0x1]
    %v383 = vadd.f32 %v381, 1e-05
    %v384 = vrsqrt.pop %v383
    %v387 = vunpack.c.l.s4 1966171168
    %v388 = vunpack.c.0.s8 %v387
    %v389 = vlaneseq
    %v390 = vshrl.u32 %v389, 7
    %v391 = vsub.s32 %v388, %v390
    %v392 = vrot.slane %v384, %v391
    %v393 = vcombine.high %v392, %v392
    %v395 = vunpack.c.l.s4 1966171168
    %v396 = vunpack.c.0.s8 %v395
    %v397 = vlaneseq
    %v398 = vshrl.u32 %v397, 7
    %v399 = vsub.s32 %v396, %v398
    %v400 = vrot.slane %v393, %v399
    %v402 = vmul.f32 %v382, %v400
    %v403 = vld [vmem:[%s5] sm:$0x1]
    %v404 = vmul.f32 %v375, %v402
    %v405 = vsub.f32 %v403, %v404
    %v407 = vlaneseq
    %v408 = vshrl.u32 %v407, 7
    %v409 = vsub.s32 0, %v408
    %v410 = vrot.slane %v405, %v409
    %v412 = vsel %vm269, %v402, %v410
    %v413 = vld [vmem:[%s3] sm:$0xff]
    %v415 = vcombine.high %v413, %v413
    %vm416 = vcmask 31744
    %v418 = vsel %vm416, %v412, 0
    %vm420 = vcmask 1043456
    %v421 = vsel %vm420, %v413, 0
    %v423 = vsel %vm420, %v415, 0
    %425 = vmatprep.subr.mxu0 %v423
    %426 = vmatpush1.msra.mxu0 %v421
    %427 = vmatprep.subr.mxu0 0.0
    %428 = vmatpush1.msra.mxu0 0.0
    %429 = vmatprep.subr.mxu0 0.0
    %430 = vmatpush1.msra.mxu0 0.0
    %431 = vmatprep.subr.mxu0 0.0
    %432 = vmatpush1.msra.mxu0 0.0
    %433 = vmatprep.subr.mxu0 0.0
    %434 = vmatpush1.msra.mxu0 0.0
    %435 = vmatprep.subr.mxu0 0.0
    %436 = vmatpush1.msra.mxu0 0.0
    %437 = vmatprep.subr.mxu0 0.0
    %438 = vmatpush1.msra.mxu0 0.0
    %439 = vmatprep.subr.mxu0 0.0
    %440 = vmatpush1.msra.mxu0 0.0
    %441 = vmatprep.subr.mxu0 0.0
    %442 = vmatpush1.msra.mxu0 0.0
    %443 = vmatprep.subr.mxu0 0.0
    %444 = vmatpush1.msra.mxu0 0.0
    %445 = vmatprep.subr.mxu0 0.0
    %446 = vmatpush1.msra.mxu0 0.0
    %447 = vmatprep.subr.mxu0 0.0
    %448 = vmatpush1.msra.mxu0 0.0
    %449 = vmatprep.subr.mxu0 0.0
    %450 = vmatpush1.msra.mxu0 0.0
    %451 = vmatprep.subr.mxu0 0.0
    %452 = vmatpush1.msra.mxu0 0.0
    %453 = vmatprep.subr.mxu0 0.0
    %454 = vmatpush1.msra.mxu0 0.0
    %455 = vmatprep.subr.mxu0 0.0
    %456 = vmatpush1.msra.mxu0 0.0
    %457 = vmatprep.subr.mxu0 0.0
    %458 = vmatpush1.msra.mxu0 0.0
    %459 = vmatprep.subr.mxu0 0.0
    %460 = vmatpush1.msra.mxu0 0.0
    %461 = vmatprep.subr.mxu0 0.0
    %462 = vmatpush1.msra.mxu0 0.0
    %463 = vmatprep.subr.mxu0 0.0
    %464 = vmatpush1.msra.mxu0 0.0
    %465 = vmatprep.subr.mxu0 0.0
    %466 = vmatpush1.msra.mxu0 0.0
    %467 = vmatprep.subr.mxu0 0.0
    %468 = vmatpush1.msra.mxu0 0.0
    %469 = vmatprep.subr.mxu0 0.0
    %470 = vmatpush1.msra.mxu0 0.0
    %471 = vmatprep.subr.mxu0 0.0
    %472 = vmatpush1.msra.mxu0 0.0
    %473 = vmatprep.subr.mxu0 0.0
    %474 = vmatpush1.msra.mxu0 0.0
    %475 = vmatprep.subr.mxu0 0.0
    %476 = vmatpush1.msra.mxu0 0.0
    %477 = vmatprep.subr.mxu0 0.0
    %478 = vmatpush1.msra.mxu0 0.0
    %479 = vmatprep.subr.mxu0 0.0
    %480 = vmatpush1.msra.mxu0 0.0
    %481 = vmatprep.subr.mxu0 0.0
    %482 = vmatpush1.msra.mxu0 0.0
    %483 = vmatprep.subr.mxu0 0.0
    %484 = vmatpush1.msra.mxu0 0.0
    %485 = vmatprep.subr.mxu0 0.0
    %486 = vmatpush1.msra.mxu0 0.0
    %487 = vmatprep.subr.mxu0 0.0
    %488 = vmatpush1.msra.mxu0 0.0
    %489 = vmatprep.mubr.f32.mxu0 0.0
    %490 = vmatmul.mubr.f32.gmra.mrb[0].mxu0 %v418
    %v491 = vpop.f32.mrb[0].mxu0
    %v492 = vadd.f32 0.0, %v491
    %v493 = vpop.f32.mrb[0].mxu0
    %v494 = vadd.f32 0.0, %v493
    %495 = vdwg.mxu0
    %v496 = vlaneseq
    %v497 = vshrl.u32 %v496, 7
    %v498 = vsub.s32 0, %v497
    %v499 = vrot.slane %v492, %v498
    %v500 = vlaneseq
    %v501 = vshrl.u32 %v500, 7
    %v502 = vsub.s32 0, %v501
    %v503 = vrot.slane %v494, %v502
    %v504 = vmul.f32 %v239, %v499
    %v505 = vmul.f32 %v241, %v503
    %v506 = vlaneseq
    %v507 = vshrl.u32 %v506, 7
    %v508 = vsub.s32 1, %v507
    %v509 = vrot.slane %v492, %v508
    %v510 = vlaneseq
    %v511 = vshrl.u32 %v510, 7
    %v512 = vsub.s32 1, %v511
    %v513 = vrot.slane %v494, %v512
    %v514 = vadd.f32 %v504, %v509
    %v515 = vadd.f32 %v505, %v513
    %v516 = vmax.f32 %v514, 0.0
    %v517 = vmax.f32 %v515, 0.0
    %v518 = vld [vmem:[#allocation7] sm:$0xff]
    %v519 = vld [vmem:[#allocation7 + $0x8] sm:$0xff]
    %v520 = vld [vmem:[#allocation7 + $0x10] sm:$0xff]
    %v521 = vld [vmem:[#allocation7 + $0x18] sm:$0xff]
    %v522 = vld [vmem:[#allocation7 + $0x20] sm:$0xff]
    %v523 = vld [vmem:[#allocation7 + $0x28] sm:$0xff]
    %v524 = vld [vmem:[#allocation7 + $0x30] sm:$0xff]
    %v525 = vld [vmem:[#allocation7 + $0x38] sm:$0xff]
    %v526 = vld [vmem:[#allocation7 + $0x40] sm:$0xff]
    %v527 = vld [vmem:[#allocation7 + $0x48] sm:$0xff]
    %v528 = vld [vmem:[#allocation7 + $0x50] sm:$0xff]
    %v529 = vld [vmem:[#allocation7 + $0x58] sm:$0xff]
    %v530 = vld [vmem:[#allocation7 + $0x60] sm:$0xff]
    %v531 = vld [vmem:[#allocation7 + $0x68] sm:$0xff]
    %v532 = vld [vmem:[#allocation7 + $0x70] sm:$0xff]
    %v533 = vld [vmem:[#allocation7 + $0x78] sm:$0xff]
    %v534 = vld [vmem:[#allocation7 + $0x80] sm:$0xff]
    %v535 = vld [vmem:[#allocation7 + $0x88] sm:$0xff]
    %v536 = vld [vmem:[#allocation7 + $0x90] sm:$0xff]
    %v537 = vld [vmem:[#allocation7 + $0x98] sm:$0xff]
    %v538 = vld [vmem:[#allocation7 + $0xa0] sm:$0xff]
    %v539 = vld [vmem:[#allocation7 + $0xa8] sm:$0xff]
    %v540 = vld [vmem:[#allocation7 + $0xb0] sm:$0xff]
    %v541 = vld [vmem:[#allocation7 + $0xb8] sm:$0xff]
    %v542 = vld [vmem:[#allocation7 + $0xc0] sm:$0xff]
    %v543 = vld [vmem:[#allocation7 + $0xc8] sm:$0xff]
    %v544 = vld [vmem:[#allocation7 + $0xd0] sm:$0xff]
    %v545 = vld [vmem:[#allocation7 + $0xd8] sm:$0xff]
    %v546 = vld [vmem:[#allocation7 + $0xe0] sm:$0xff]
    %v547 = vld [vmem:[#allocation7 + $0xe8] sm:$0xff]
    %v548 = vld [vmem:[#allocation7 + $0xf0] sm:$0xff]
    %v549 = vld [vmem:[#allocation7 + $0xf8] sm:$0xff]
    %550 = vmatprep.subr.mxu0 0.0
    %551 = vmatpush1.msra.mxu0 %v518
    %552 = vmatprep.subr.mxu0 0.0
    %553 = vmatpush1.msra.mxu0 %v519
    %554 = vmatprep.subr.mxu0 0.0
    %555 = vmatpush1.msra.mxu0 %v520
    %556 = vmatprep.subr.mxu0 0.0
    %557 = vmatpush1.msra.mxu0 %v521
    %558 = vmatprep.subr.mxu0 0.0
    %559 = vmatpush1.msra.mxu0 %v522
    %560 = vmatprep.subr.mxu0 0.0
    %561 = vmatpush1.msra.mxu0 %v523
    %562 = vmatprep.subr.mxu0 0.0
    %563 = vmatpush1.msra.mxu0 %v524
    %564 = vmatprep.subr.mxu0 0.0
    %565 = vmatpush1.msra.mxu0 %v525
    %566 = vmatprep.subr.mxu0 0.0
    %567 = vmatpush1.msra.mxu0 %v526
    %568 = vmatprep.subr.mxu0 0.0
    %569 = vmatpush1.msra.mxu0 %v527
    %570 = vmatprep.subr.mxu0 0.0
    %571 = vmatpush1.msra.mxu0 %v528
    %572 = vmatprep.subr.mxu0 0.0
    %573 = vmatpush1.msra.mxu0 %v529
    %574 = vmatprep.subr.mxu0 0.0
    %575 = vmatpush1.msra.mxu0 %v530
    %576 = vmatprep.subr.mxu0 0.0
    %577 = vmatpush1.msra.mxu0 %v531
    %578 = vmatprep.subr.mxu0 0.0
    %579 = vmatpush1.msra.mxu0 %v532
    %580 = vmatprep.subr.mxu0 0.0
    %581 = vmatpush1.msra.mxu0 %v533
    %582 = vmatprep.subr.mxu0 0.0
    %583 = vmatpush1.msra.mxu0 %v534
    %584 = vmatprep.subr.mxu0 0.0
    %585 = vmatpush1.msra.mxu0 %v535
    %586 = vmatprep.subr.mxu0 0.0
    %587 = vmatpush1.msra.mxu0 %v536
    %588 = vmatprep.subr.mxu0 0.0
    %589 = vmatpush1.msra.mxu0 %v537
    %590 = vmatprep.subr.mxu0 0.0
    %591 = vmatpush1.msra.mxu0 %v538
    %592 = vmatprep.subr.mxu0 0.0
    %593 = vmatpush1.msra.mxu0 %v539
    %594 = vmatprep.subr.mxu0 0.0
    %595 = vmatpush1.msra.mxu0 %v540
    %596 = vmatprep.subr.mxu0 0.0
    %597 = vmatpush1.msra.mxu0 %v541
    %598 = vmatprep.subr.mxu0 0.0
    %599 = vmatpush1.msra.mxu0 %v542
    %600 = vmatprep.subr.mxu0 0.0
    %601 = vmatpush1.msra.mxu0 %v543
    %602 = vmatprep.subr.mxu0 0.0
    %603 = vmatpush1.msra.mxu0 %v544
    %604 = vmatprep.subr.mxu0 0.0
    %605 = vmatpush1.msra.mxu0 %v545
    %606 = vmatprep.subr.mxu0 0.0
    %607 = vmatpush1.msra.mxu0 %v546
    %608 = vmatprep.subr.mxu0 0.0
    %609 = vmatpush1.msra.mxu0 %v547
    %610 = vmatprep.subr.mxu0 0.0
    %611 = vmatpush1.msra.mxu0 %v548
    %612 = vmatprep.subr.mxu0 0.0
    %613 = vmatpush1.msra.mxu0 %v549
    %614 = vmatprep.mubr.f32.mxu0 %v517
    %615 = vmatmul.mubr.f32.gmra.mrb[0].mxu0 %v516
    %v616 = vpop.f32.mrb[0].mxu0
    %v617 = vadd.f32 0.0, %v616
    %v618 = vpop.f32.mrb[0].mxu0
    %619 = vdwg.mxu0
    %v620 = vrot.slane %v617, 4
    %v621 = vadd.f32 %v617, %v620
    %v622 = vrot.slane %v621, 2
    %v623 = vadd.f32 %v621, %v622
    %v624 = vrot.slane %v623, 1
    %v625 = vadd.f32 %v623, %v624
    %v626 = vmul.f32 %v617, %v617
    %v627 = vrot.slane %v626, 4
    %v628 = vadd.f32 %v626, %v627
    %v629 = vrot.slane %v628, 2
    %v630 = vadd.f32 %v628, %v629
    %v631 = vrot.slane %v630, 1
    %v632 = vadd.f32 %v630, %v631
    %v633 = vsel %vm269, %v625, %v632
    %v634 = vld [vmem:[%s7] sm:$0xff]
    %v635 = vld [vmem:[%s7 + $0x8] sm:$0xff]
    %v636 = vld [vmem:[%s7 + $0x10] sm:$0xff]
    %v637 = vld [vmem:[%s7 + $0x18] sm:$0xff]
    %v638 = vld [vmem:[%s7 + $0x20] sm:$0xff]
    %v639 = vld [vmem:[%s7 + $0x28] sm:$0xff]
    %v640 = vld [vmem:[%s7 + $0x30] sm:$0xff]
    %v641 = vld [vmem:[%s7 + $0x38] sm:$0xff]
    %v642 = vld [vmem:[%s7 + $0x40] sm:$0xff]
    %v643 = vld [vmem:[%s7 + $0x48] sm:$0xff]
    %v644 = vld [vmem:[%s7 + $0x50] sm:$0xff]
    %v645 = vld [vmem:[%s7 + $0x58] sm:$0xff]
    %v646 = vld [vmem:[%s7 + $0x60] sm:$0xff]
    %v647 = vld [vmem:[%s7 + $0x68] sm:$0xff]
    %v648 = vld [vmem:[%s7 + $0x70] sm:$0xff]
    %v649 = vld [vmem:[%s7 + $0x78] sm:$0xff]
    %650 = vmatprep.subr.mxu0 0.0
    %651 = vmatpush1.msra.mxu0 %v634
    %652 = vmatprep.subr.mxu0 0.0
    %653 = vmatpush1.msra.mxu0 %v635
    %654 = vmatprep.subr.mxu0 0.0
    %655 = vmatpush1.msra.mxu0 %v636
    %656 = vmatprep.subr.mxu0 0.0
    %657 = vmatpush1.msra.mxu0 %v637
    %658 = vmatprep.subr.mxu0 0.0
    %659 = vmatpush1.msra.mxu0 %v638
    %660 = vmatprep.subr.mxu0 0.0
    %661 = vmatpush1.msra.mxu0 %v639
    %662 = vmatprep.subr.mxu0 0.0
    %663 = vmatpush1.msra.mxu0 %v640
    %664 = vmatprep.subr.mxu0 0.0
    %665 = vmatpush1.msra.mxu0 %v641
    %666 = vmatprep.subr.mxu0 0.0
    %667 = vmatpush1.msra.mxu0 %v642
    %668 = vmatprep.subr.mxu0 0.0
    %669 = vmatpush1.msra.mxu0 %v643
    %670 = vmatprep.subr.mxu0 0.0
    %671 = vmatpush1.msra.mxu0 %v644
    %672 = vmatprep.subr.mxu0 0.0
    %673 = vmatpush1.msra.mxu0 %v645
    %674 = vmatprep.subr.mxu0 0.0
    %675 = vmatpush1.msra.mxu0 %v646
    %676 = vmatprep.subr.mxu0 0.0
    %677 = vmatpush1.msra.mxu0 %v647
    %678 = vmatprep.subr.mxu0 0.0
    %679 = vmatpush1.msra.mxu0 %v648
    %680 = vmatprep.subr.mxu0 0.0
    %681 = vmatpush1.msra.mxu0 %v649
    %682 = vmatprep.subr.mxu0 0.0
    %683 = vmatpush1.msra.mxu0 0.0
    %684 = vmatprep.subr.mxu0 0.0
    %685 = vmatpush1.msra.mxu0 0.0
    %686 = vmatprep.subr.mxu0 0.0
    %687 = vmatpush1.msra.mxu0 0.0
    %688 = vmatprep.subr.mxu0 0.0
    %689 = vmatpush1.msra.mxu0 0.0
    %690 = vmatprep.subr.mxu0 0.0
    %691 = vmatpush1.msra.mxu0 0.0
    %692 = vmatprep.subr.mxu0 0.0
    %693 = vmatpush1.msra.mxu0 0.0
    %694 = vmatprep.subr.mxu0 0.0
    %695 = vmatpush1.msra.mxu0 0.0
    %696 = vmatprep.subr.mxu0 0.0
    %697 = vmatpush1.msra.mxu0 0.0
    %698 = vmatprep.subr.mxu0 0.0
    %699 = vmatpush1.msra.mxu0 0.0
    %700 = vmatprep.subr.mxu0 0.0
    %701 = vmatpush1.msra.mxu0 0.0
    %702 = vmatprep.subr.mxu0 0.0
    %703 = vmatpush1.msra.mxu0 0.0
    %704 = vmatprep.subr.mxu0 0.0
    %705 = vmatpush1.msra.mxu0 0.0
    %706 = vmatprep.subr.mxu0 0.0
    %707 = vmatpush1.msra.mxu0 0.0
    %708 = vmatprep.subr.mxu0 0.0
    %709 = vmatpush1.msra.mxu0 0.0
    %710 = vmatprep.subr.mxu0 0.0
    %711 = vmatpush1.msra.mxu0 0.0
    %712 = vmatprep.subr.mxu0 0.0
    %713 = vmatpush1.msra.mxu0 0.0
    %714 = vmatprep.mubr.f32.mxu0 0.0
    %715 = vmatmul.mubr.f32.gmra.mrb[0].mxu0 %v633
    %v716 = vpop.f32.mrb[0].mxu0
    %v717 = vadd.f32 0.0, %v716
    %v718 = vpop.f32.mrb[0].mxu0
    %719 = vdwg.mxu0
    %v720 = vrcp.pop 128.0
    %v721 = vmul.f32 %v717, %v720
    %v722 = vmul.f32 %v721, %v721
    %v724 = vrot.slane %v722, 7
    %v726 = vsub.f32 %v721, %v724
    %v727 = vmax.f32 %v726, 0.0
    %v728 = vld [vmem:[%s9] sm:$0x1]
    %v729 = vadd.f32 %v727, 1e-05
    %v730 = vrsqrt.pop %v729
    %v733 = vunpack.c.l.s4 1966171168
    %v734 = vunpack.c.0.s8 %v733
    %v735 = vlaneseq
    %v736 = vshrl.u32 %v735, 7
    %v737 = vsub.s32 %v734, %v736
    %v738 = vrot.slane %v730, %v737
    %v739 = vcombine.high %v738, %v738
    %v741 = vunpack.c.l.s4 1966171168
    %v742 = vunpack.c.0.s8 %v741
    %v743 = vlaneseq
    %v744 = vshrl.u32 %v743, 7
    %v745 = vsub.s32 %v742, %v744
    %v746 = vrot.slane %v739, %v745
    %v748 = vmul.f32 %v728, %v746
    %v749 = vld [vmem:[%s10] sm:$0x1]
    %v750 = vmul.f32 %v721, %v748
    %v751 = vsub.f32 %v749, %v750
    %v753 = vlaneseq
    %v754 = vshrl.u32 %v753, 7
    %v755 = vsub.s32 0, %v754
    %v756 = vrot.slane %v751, %v755
    %v758 = vsel %vm269, %v748, %v756
    %v759 = vld [vmem:[%s8] sm:$0xff]
    %vm760 = vcmask 64512
    %v762 = vsel %vm760, %v758, 0
    %764 = vmatprep.subr.mxu0 0.0
    %765 = vmatpush1.msra.mxu0 %v759
    %766 = vmatprep.subr.mxu0 0.0
    %767 = vmatpush1.msra.mxu0 0.0
    %768 = vmatprep.subr.mxu0 0.0
    %769 = vmatpush1.msra.mxu0 0.0
    %770 = vmatprep.subr.mxu0 0.0
    %771 = vmatpush1.msra.mxu0 0.0
    %772 = vmatprep.subr.mxu0 0.0
    %773 = vmatpush1.msra.mxu0 0.0
    %774 = vmatprep.subr.mxu0 0.0
    %775 = vmatpush1.msra.mxu0 0.0
    %776 = vmatprep.subr.mxu0 0.0
    %777 = vmatpush1.msra.mxu0 0.0
    %778 = vmatprep.subr.mxu0 0.0
    %779 = vmatpush1.msra.mxu0 0.0
    %780 = vmatprep.subr.mxu0 0.0
    %781 = vmatpush1.msra.mxu0 0.0
    %782 = vmatprep.subr.mxu0 0.0
    %783 = vmatpush1.msra.mxu0 0.0
    %784 = vmatprep.subr.mxu0 0.0
    %785 = vmatpush1.msra.mxu0 0.0
    %786 = vmatprep.subr.mxu0 0.0
    %787 = vmatpush1.msra.mxu0 0.0
    %788 = vmatprep.subr.mxu0 0.0
    %789 = vmatpush1.msra.mxu0 0.0
    %790 = vmatprep.subr.mxu0 0.0
    %791 = vmatpush1.msra.mxu0 0.0
    %792 = vmatprep.subr.mxu0 0.0
    %793 = vmatpush1.msra.mxu0 0.0
    %794 = vmatprep.subr.mxu0 0.0
    %795 = vmatpush1.msra.mxu0 0.0
    %796 = vmatprep.subr.mxu0 0.0
    %797 = vmatpush1.msra.mxu0 0.0
    %798 = vmatprep.subr.mxu0 0.0
    %799 = vmatpush1.msra.mxu0 0.0
    %800 = vmatprep.subr.mxu0 0.0
    %801 = vmatpush1.msra.mxu0 0.0
    %802 = vmatprep.subr.mxu0 0.0
    %803 = vmatpush1.msra.mxu0 0.0
    %804 = vmatprep.subr.mxu0 0.0
    %805 = vmatpush1.msra.mxu0 0.0
    %806 = vmatprep.subr.mxu0 0.0
    %807 = vmatpush1.msra.mxu0 0.0
    %808 = vmatprep.subr.mxu0 0.0
    %809 = vmatpush1.msra.mxu0 0.0
    %810 = vmatprep.subr.mxu0 0.0
    %811 = vmatpush1.msra.mxu0 0.0
    %812 = vmatprep.subr.mxu0 0.0
    %813 = vmatpush1.msra.mxu0 0.0
    %814 = vmatprep.subr.mxu0 0.0
    %815 = vmatpush1.msra.mxu0 0.0
    %816 = vmatprep.subr.mxu0 0.0
    %817 = vmatpush1.msra.mxu0 0.0
    %818 = vmatprep.subr.mxu0 0.0
    %819 = vmatpush1.msra.mxu0 0.0
    %820 = vmatprep.subr.mxu0 0.0
    %821 = vmatpush1.msra.mxu0 0.0
    %822 = vmatprep.subr.mxu0 0.0
    %823 = vmatpush1.msra.mxu0 0.0
    %824 = vmatprep.subr.mxu0 0.0
    %825 = vmatpush1.msra.mxu0 0.0
    %826 = vmatprep.subr.mxu0 0.0
    %827 = vmatpush1.msra.mxu0 0.0
    %828 = vmatprep.mubr.f32.mxu0 0.0
    %829 = vmatmul.mubr.f32.gmra.mrb[0].mxu0 %v762
    %v830 = vpop.f32.mrb[0].mxu0
    %v831 = vadd.f32 0.0, %v830
    %v832 = vpop.f32.mrb[0].mxu0
    %833 = vdwg.mxu0
    %v834 = vlaneseq
    %v835 = vshrl.u32 %v834, 7
    %v836 = vsub.s32 0, %v835
    %v837 = vrot.slane %v831, %v836
    %v838 = vmul.f32 %v617, %v837
    %v839 = vlaneseq
    %v840 = vshrl.u32 %v839, 7
    %v841 = vsub.s32 1, %v840
    %v842 = vrot.slane %v831, %v841
    %v843 = vadd.f32 %v838, %v842
    %v844 = vmax.f32 %v843, 0.0
    %v845 = vld [vmem:[#allocation8] sm:$0xff]
    %v846 = vld [vmem:[#allocation8 + $0x8] sm:$0xff]
    %v847 = vld [vmem:[#allocation8 + $0x10] sm:$0xff]
    %v848 = vld [vmem:[#allocation8 + $0x18] sm:$0xff]
    %v849 = vld [vmem:[#allocation8 + $0x20] sm:$0xff]
    %v850 = vld [vmem:[#allocation8 + $0x28] sm:$0xff]
    %v851 = vld [vmem:[#allocation8 + $0x30] sm:$0xff]
    %v852 = vld [vmem:[#allocation8 + $0x38] sm:$0xff]
    %v853 = vld [vmem:[#allocation8 + $0x40] sm:$0xff]
    %v854 = vld [vmem:[#allocation8 + $0x48] sm:$0xff]
    %v855 = vld [vmem:[#allocation8 + $0x50] sm:$0xff]
    %v856 = vld [vmem:[#allocation8 + $0x58] sm:$0xff]
    %v857 = vld [vmem:[#allocation8 + $0x60] sm:$0xff]
    %v858 = vld [vmem:[#allocation8 + $0x68] sm:$0xff]
    %v859 = vld [vmem:[#allocation8 + $0x70] sm:$0xff]
    %v860 = vld [vmem:[#allocation8 + $0x78] sm:$0xff]
    %v861 = vld [vmem:[#allocation8 + $0x80] sm:$0xff]
    %v862 = vld [vmem:[#allocation8 + $0x88] sm:$0xff]
    %v863 = vld [vmem:[#allocation8 + $0x90] sm:$0xff]
    %v864 = vld [vmem:[#allocation8 + $0x98] sm:$0xff]
    %v865 = vld [vmem:[#allocation8 + $0xa0] sm:$0xff]
    %v866 = vld [vmem:[#allocation8 + $0xa8] sm:$0xff]
    %v867 = vld [vmem:[#allocation8 + $0xb0] sm:$0xff]
    %v868 = vld [vmem:[#allocation8 + $0xb8] sm:$0xff]
    %v869 = vld [vmem:[#allocation8 + $0xc0] sm:$0xff]
    %v870 = vld [vmem:[#allocation8 + $0xc8] sm:$0xff]
    %v871 = vld [vmem:[#allocation8 + $0xd0] sm:$0xff]
    %v872 = vld [vmem:[#allocation8 + $0xd8] sm:$0xff]
    %v873 = vld [vmem:[#allocation8 + $0xe0] sm:$0xff]
    %v874 = vld [vmem:[#allocation8 + $0xe8] sm:$0xff]
    %v875 = vld [vmem:[#allocation8 + $0xf0] sm:$0xff]
    %v876 = vld [vmem:[#allocation8 + $0xf8] sm:$0xff]
    %v877 = vld [vmem:[%s12] sm:$0x3]
    %v879 = vlaneseq
    %v880 = vshrl.u32 %v879, 7
    %v881 = vsub.s32 0, %v880
    %v882 = vrot.slane %v877, %v881
    %v883 = vlaneseq
    %v884 = vshrl.u32 %v883, 7
    %v885 = vsub.s32 1, %v884
    %v886 = vrot.slane %v877, %v885
    %889 = vmatprep.subr.mxu0 %v846
    %890 = vmatpush1.msra.mxu0 %v845
    %891 = vmatprep.subr.mxu0 %v848
    %892 = vmatpush1.msra.mxu0 %v847
    %893 = vmatprep.subr.mxu0 %v850
    %894 = vmatpush1.msra.mxu0 %v849
    %895 = vmatprep.subr.mxu0 %v852
    %896 = vmatpush1.msra.mxu0 %v851
    %897 = vmatprep.subr.mxu0 %v854
    %898 = vmatpush1.msra.mxu0 %v853
    %899 = vmatprep.subr.mxu0 %v856
    %900 = vmatpush1.msra.mxu0 %v855
    %901 = vmatprep.subr.mxu0 %v858
    %902 = vmatpush1.msra.mxu0 %v857
    %903 = vmatprep.subr.mxu0 %v860
    %904 = vmatpush1.msra.mxu0 %v859
    %905 = vmatprep.subr.mxu0 %v862
    %906 = vmatpush1.msra.mxu0 %v861
    %907 = vmatprep.subr.mxu0 %v864
    %908 = vmatpush1.msra.mxu0 %v863
    %909 = vmatprep.subr.mxu0 %v866
    %910 = vmatpush1.msra.mxu0 %v865
    %911 = vmatprep.subr.mxu0 %v868
    %912 = vmatpush1.msra.mxu0 %v867
    %913 = vmatprep.subr.mxu0 %v870
    %914 = vmatpush1.msra.mxu0 %v869
    %915 = vmatprep.subr.mxu0 %v872
    %916 = vmatpush1.msra.mxu0 %v871
    %917 = vmatprep.subr.mxu0 %v874
    %918 = vmatpush1.msra.mxu0 %v873
    %919 = vmatprep.subr.mxu0 %v876
    %920 = vmatpush1.msra.mxu0 %v875
    %921 = vmatprep.subr.mxu0 0.0
    %922 = vmatpush1.msra.mxu0 0.0
    %923 = vmatprep.subr.mxu0 0.0
    %924 = vmatpush1.msra.mxu0 0.0
    %925 = vmatprep.subr.mxu0 0.0
    %926 = vmatpush1.msra.mxu0 0.0
    %927 = vmatprep.subr.mxu0 0.0
    %928 = vmatpush1.msra.mxu0 0.0
    %929 = vmatprep.subr.mxu0 0.0
    %930 = vmatpush1.msra.mxu0 0.0
    %931 = vmatprep.subr.mxu0 0.0
    %932 = vmatpush1.msra.mxu0 0.0
    %933 = vmatprep.subr.mxu0 0.0
    %934 = vmatpush1.msra.mxu0 0.0
    %935 = vmatprep.subr.mxu0 0.0
    %936 = vmatpush1.msra.mxu0 0.0
    %937 = vmatprep.subr.mxu0 0.0
    %938 = vmatpush1.msra.mxu0 0.0
    %939 = vmatprep.subr.mxu0 0.0
    %940 = vmatpush1.msra.mxu0 0.0
    %941 = vmatprep.subr.mxu0 0.0
    %942 = vmatpush1.msra.mxu0 0.0
    %943 = vmatprep.subr.mxu0 0.0
    %944 = vmatpush1.msra.mxu0 0.0
    %945 = vmatprep.subr.mxu0 0.0
    %946 = vmatpush1.msra.mxu0 0.0
    %947 = vmatprep.subr.mxu0 0.0
    %948 = vmatpush1.msra.mxu0 0.0
    %949 = vmatprep.subr.mxu0 0.0
    %950 = vmatpush1.msra.mxu0 0.0
    %951 = vmatprep.subr.mxu0 0.0
    %952 = vmatpush1.msra.mxu0 0.0
    %953 = vmatprep.mubr.f32.mxu0 0.0
    %954 = vmatmul.mubr.f32.gmra.mrb[0].mxu0 %v844
    %v955 = vpop.f32.mrb[0].mxu0
    %v956 = vadd.f32 %v882, %v955
    %v957 = vpop.f32.mrb[0].mxu0
    %v958 = vadd.f32 %v886, %v957
    %959 = vdwg.mxu0
    %v960 = vld [vmem:[%s13] sm:$0xff]
    %v961 = vld [vmem:[%s13 + $0x8] sm:$0xff]
    %v962 = vld [vmem:[%s14] sm:$0x1]
    %vm963 = vcmask 130048
    %v965 = vsel %vm963, 0.0, 0
    %967 = vmatprep.subr.mxu0 0.0
    %968 = vmatpush1.msra.mxu0 %v960
    %969 = vmatprep.subr.mxu0 0.0
    %970 = vmatpush1.msra.mxu0 %v961
    %971 = vmatprep.subr.mxu0 0.0
    %972 = vmatpush1.msra.mxu0 0.0
    %973 = vmatprep.subr.mxu0 0.0
    %974 = vmatpush1.msra.mxu0 0.0
    %975 = vmatprep.subr.mxu0 0.0
    %976 = vmatpush1.msra.mxu0 0.0
    %977 = vmatprep.subr.mxu0 0.0
    %978 = vmatpush1.msra.mxu0 0.0
    %979 = vmatprep.subr.mxu0 0.0
    %980 = vmatpush1.msra.mxu0 0.0
    %981 = vmatprep.subr.mxu0 0.0
    %982 = vmatpush1.msra.mxu0 0.0
    %983 = vmatprep.subr.mxu0 0.0
    %984 = vmatpush1.msra.mxu0 0.0
    %985 = vmatprep.subr.mxu0 0.0
    %986 = vmatpush1.msra.mxu0 0.0
    %987 = vmatprep.subr.mxu0 0.0
    %988 = vmatpush1.msra.mxu0 0.0
    %989 = vmatprep.subr.mxu0 0.0
    %990 = vmatpush1.msra.mxu0 0.0
    %991 = vmatprep.subr.mxu0 0.0
    %992 = vmatpush1.msra.mxu0 0.0
    %993 = vmatprep.subr.mxu0 0.0
    %994 = vmatpush1.msra.mxu0 0.0
    %995 = vmatprep.subr.mxu0 0.0
    %996 = vmatpush1.msra.mxu0 0.0
    %997 = vmatprep.subr.mxu0 0.0
    %998 = vmatpush1.msra.mxu0 0.0
    %999 = vmatprep.subr.mxu0 0.0
    %1000 = vmatpush1.msra.mxu0 0.0
    %1001 = vmatprep.subr.mxu0 0.0
    %1002 = vmatpush1.msra.mxu0 0.0
    %1003 = vmatprep.subr.mxu0 0.0
    %1004 = vmatpush1.msra.mxu0 0.0
    %1005 = vmatprep.subr.mxu0 0.0
    %1006 = vmatpush1.msra.mxu0 0.0
    %1007 = vmatprep.subr.mxu0 0.0
    %1008 = vmatpush1.msra.mxu0 0.0
    %1009 = vmatprep.subr.mxu0 0.0
    %1010 = vmatpush1.msra.mxu0 0.0
    %1011 = vmatprep.subr.mxu0 0.0
    %1012 = vmatpush1.msra.mxu0 0.0
    %1013 = vmatprep.subr.mxu0 0.0
    %1014 = vmatpush1.msra.mxu0 0.0
    %1015 = vmatprep.subr.mxu0 0.0
    %1016 = vmatpush1.msra.mxu0 0.0
    %1017 = vmatprep.subr.mxu0 0.0
    %1018 = vmatpush1.msra.mxu0 0.0
    %1019 = vmatprep.subr.mxu0 0.0
    %1020 = vmatpush1.msra.mxu0 0.0
    %1021 = vmatprep.subr.mxu0 0.0
    %1022 = vmatpush1.msra.mxu0 0.0
    %1023 = vmatprep.subr.mxu0 0.0
    %1024 = vmatpush1.msra.mxu0 0.0
    %1025 = vmatprep.subr.mxu0 0.0
    %1026 = vmatpush1.msra.mxu0 0.0
    %1027 = vmatprep.subr.mxu0 0.0
    %1028 = vmatpush1.msra.mxu0 0.0
    %1029 = vmatprep.subr.mxu0 0.0
    %1030 = vmatpush1.msra.mxu0 0.0
    %1031 = vmatprep.mubr.f32.mxu0 0.0
    %1032 = vmatmul.mubr.f32.gmra.mrb[0].mxu0 %v965
    %v1033 = vpop.f32.mrb[0].mxu0
    %v1034 = vadd.f32 0.0, %v1033
    %v1035 = vpop.f32.mrb[0].mxu0
    %1036 = vdwg.mxu0
    %v1037 = vadd.f32 %v956, %v1034
    %v1038 = vxor.u32 %v1037, 2147483648
    %v1039 = vmul.f32 %v1038, 1.442695
    %v1040 = vpow.pop %v1039
    %v1041 = vadd.f32 %v1040, 1.0
    %v1042 = vrcp.pop %v1041
    %v1043 = vmul.f32 1.0, %v1042
    %v1045 = vlaneseq
    %v1046 = vshrl.u32 %v1045, 7
    %v1047 = vsub.s32 0, %v1046
    %v1048 = vrot.slane %v962, %v1047
    %1049 = vrot.lane.b32.xlu0 %v1048, 32
    %v1050 = vpop.permute.xlu0 %1049
    %v1052 = vadd.f32 %v1034, %v1050
    %1054 = vrot.lane.b32.xlu0 %v1052, 96
    %v1055 = vpop.permute.xlu0 %1054
    %v1057 = vmul.f32 %v1043, %v1055
    %1059 = vrot.lane.b32.xlu0 %v1057, 32
    %v1060 = vpop.permute.xlu0 %1059
    %v1062 = vadd.f32 %v956, %v1060
    %v1063 = vtanh.pop %v1062
    %v1064 = vsub.f32 1.0, %v1043
    %1066 = vrot.lane.b32.xlu0 %v1063, 112
    %v1067 = vpop.permute.xlu0 %1066
    %v1069 = vmul.f32 %v1064, %v1067
    %v1070 = vmul.f32 %v1043, 0.0
    %v1071 = vadd.f32 %v1069, %v1070
    %1073 = vrot.lane.b32.xlu0 %v1071, 112
    %v1074 = vpop.permute.xlu0 %1073
    %v1075 = vsel %vm963, %v1074, 0
    %1077 = vmatprep.subr.mxu0 0.0
    %1078 = vmatpush1.msra.mxu0 %v960
    %1079 = vmatprep.subr.mxu0 0.0
    %1080 = vmatpush1.msra.mxu0 %v961
    %1081 = vmatprep.subr.mxu0 0.0
    %1082 = vmatpush1.msra.mxu0 0.0
    %1083 = vmatprep.subr.mxu0 0.0
    %1084 = vmatpush1.msra.mxu0 0.0
    %1085 = vmatprep.subr.mxu0 0.0
    %1086 = vmatpush1.msra.mxu0 0.0
    %1087 = vmatprep.subr.mxu0 0.0
    %1088 = vmatpush1.msra.mxu0 0.0
    %1089 = vmatprep.subr.mxu0 0.0
    %1090 = vmatpush1.msra.mxu0 0.0
    %1091 = vmatprep.subr.mxu0 0.0
    %1092 = vmatpush1.msra.mxu0 0.0
    %1093 = vmatprep.subr.mxu0 0.0
    %1094 = vmatpush1.msra.mxu0 0.0
    %1095 = vmatprep.subr.mxu0 0.0
    %1096 = vmatpush1.msra.mxu0 0.0
    %1097 = vmatprep.subr.mxu0 0.0
    %1098 = vmatpush1.msra.mxu0 0.0
    %1099 = vmatprep.subr.mxu0 0.0
    %1100 = vmatpush1.msra.mxu0 0.0
    %1101 = vmatprep.subr.mxu0 0.0
    %1102 = vmatpush1.msra.mxu0 0.0
    %1103 = vmatprep.subr.mxu0 0.0
    %1104 = vmatpush1.msra.mxu0 0.0
    %1105 = vmatprep.subr.mxu0 0.0
    %1106 = vmatpush1.msra.mxu0 0.0
    %1107 = vmatprep.subr.mxu0 0.0
    %1108 = vmatpush1.msra.mxu0 0.0
    %1109 = vmatprep.subr.mxu0 0.0
    %1110 = vmatpush1.msra.mxu0 0.0
    %1111 = vmatprep.subr.mxu0 0.0
    %1112 = vmatpush1.msra.mxu0 0.0
    %1113 = vmatprep.subr.mxu0 0.0
    %1114 = vmatpush1.msra.mxu0 0.0
    %1115 = vmatprep.subr.mxu0 0.0
    %1116 = vmatpush1.msra.mxu0 0.0
    %1117 = vmatprep.subr.mxu0 0.0
    %1118 = vmatpush1.msra.mxu0 0.0
    %1119 = vmatprep.subr.mxu0 0.0
    %1120 = vmatpush1.msra.mxu0 0.0
    %1121 = vmatprep.subr.mxu0 0.0
    %1122 = vmatpush1.msra.mxu0 0.0
    %1123 = vmatprep.subr.mxu0 0.0
    %1124 = vmatpush1.msra.mxu0 0.0
    %1125 = vmatprep.subr.mxu0 0.0
    %1126 = vmatpush1.msra.mxu0 0.0
    %1127 = vmatprep.subr.mxu0 0.0
    %1128 = vmatpush1.msra.mxu0 0.0
    %1129 = vmatprep.subr.mxu0 0.0
    %1130 = vmatpush1.msra.mxu0 0.0
    %1131 = vmatprep.subr.mxu0 0.0
    %1132 = vmatpush1.msra.mxu0 0.0
    %1133 = vmatprep.subr.mxu0 0.0
    %1134 = vmatpush1.msra.mxu0 0.0
    %1135 = vmatprep.subr.mxu0 0.0
    %1136 = vmatpush1.msra.mxu0 0.0
    %1137 = vmatprep.subr.mxu0 0.0
    %1138 = vmatpush1.msra.mxu0 0.0
    %1139 = vmatprep.subr.mxu0 0.0
    %1140 = vmatpush1.msra.mxu0 0.0
    %1141 = vmatprep.mubr.f32.mxu0 0.0
    %1142 = vmatmul.mubr.f32.gmra.mrb[0].mxu0 %v1075
    %v1143 = vpop.f32.mrb[0].mxu0
    %v1144 = vadd.f32 0.0, %v1143
    %v1145 = vpop.f32.mrb[0].mxu0
    %1146 = vdwg.mxu0
    %1148 = vrot.lane.b32.xlu0 %v1144, 48
    %v1149 = vpop.permute.xlu0 %1148
    %v1151 = vadd.f32 %v956, %v1149
    %v1152 = vxor.u32 %v1151, 2147483648
    %v1153 = vmul.f32 %v1152, 1.442695
    %v1154 = vpow.pop %v1153
    %v1155 = vadd.f32 %v1154, 1.0
    %v1156 = vrcp.pop %v1155
    %v1157 = vmul.f32 1.0, %v1156
    %v1158 = vadd.f32 %v1144, %v1050
    %1160 = vrot.lane.b32.xlu0 %v1158, 16
    %v1161 = vpop.permute.xlu0 %1160
    %v1163 = vmul.f32 %v1157, %v1161
    %1165 = vrot.lane.b32.xlu0 %v1163, 32
    %v1166 = vpop.permute.xlu0 %1165
    %v1168 = vadd.f32 %v956, %v1166
    %v1169 = vtanh.pop %v1168
    %v1170 = vsub.f32 1.0, %v1157
    %1172 = vrot.lane.b32.xlu0 %v1169, 112
    %v1173 = vpop.permute.xlu0 %1172
    %v1175 = vmul.f32 %v1170, %v1173
    %1176 = vrot.lane.b32.xlu0 %v1071, 48
    %v1177 = vpop.permute.xlu0 %1176
    %v1179 = vmul.f32 %v1157, %v1177
    %v1180 = vadd.f32 %v1175, %v1179
    %1182 = vrot.lane.b32.xlu0 %v1180, 64
    %v1183 = vpop.permute.xlu0 %1182
    %v1184 = vsel %vm963, %v1183, 0
    %1186 = vmatprep.subr.mxu0 0.0
    %1187 = vmatpush1.msra.mxu0 %v960
    %1188 = vmatprep.subr.mxu0 0.0
    %1189 = vmatpush1.msra.mxu0 %v961
    %1190 = vmatprep.subr.mxu0 0.0
    %1191 = vmatpush1.msra.mxu0 0.0
    %1192 = vmatprep.subr.mxu0 0.0
    %1193 = vmatpush1.msra.mxu0 0.0
    %1194 = vmatprep.subr.mxu0 0.0
    %1195 = vmatpush1.msra.mxu0 0.0
    %1196 = vmatprep.subr.mxu0 0.0
    %1197 = vmatpush1.msra.mxu0 0.0
    %1198 = vmatprep.subr.mxu0 0.0
    %1199 = vmatpush1.msra.mxu0 0.0
    %1200 = vmatprep.subr.mxu0 0.0
    %1201 = vmatpush1.msra.mxu0 0.0
    %1202 = vmatprep.subr.mxu0 0.0
    %1203 = vmatpush1.msra.mxu0 0.0
    %1204 = vmatprep.subr.mxu0 0.0
    %1205 = vmatpush1.msra.mxu0 0.0
    %1206 = vmatprep.subr.mxu0 0.0
    %1207 = vmatpush1.msra.mxu0 0.0
    %1208 = vmatprep.subr.mxu0 0.0
    %1209 = vmatpush1.msra.mxu0 0.0
    %1210 = vmatprep.subr.mxu0 0.0
    %1211 = vmatpush1.msra.mxu0 0.0
    %1212 = vmatprep.subr.mxu0 0.0
    %1213 = vmatpush1.msra.mxu0 0.0
    %1214 = vmatprep.subr.mxu0 0.0
    %1215 = vmatpush1.msra.mxu0 0.0
    %1216 = vmatprep.subr.mxu0 0.0
    %1217 = vmatpush1.msra.mxu0 0.0
    %1218 = vmatprep.subr.mxu0 0.0
    %1219 = vmatpush1.msra.mxu0 0.0
    %1220 = vmatprep.subr.mxu0 0.0
    %1221 = vmatpush1.msra.mxu0 0.0
    %1222 = vmatprep.subr.mxu0 0.0
    %1223 = vmatpush1.msra.mxu0 0.0
    %1224 = vmatprep.subr.mxu0 0.0
    %1225 = vmatpush1.msra.mxu0 0.0
    %1226 = vmatprep.subr.mxu0 0.0
    %1227 = vmatpush1.msra.mxu0 0.0
    %1228 = vmatprep.subr.mxu0 0.0
    %1229 = vmatpush1.msra.mxu0 0.0
    %1230 = vmatprep.subr.mxu0 0.0
    %1231 = vmatpush1.msra.mxu0 0.0
    %1232 = vmatprep.subr.mxu0 0.0
    %1233 = vmatpush1.msra.mxu0 0.0
    %1234 = vmatprep.subr.mxu0 0.0
    %1235 = vmatpush1.msra.mxu0 0.0
    %1236 = vmatprep.subr.mxu0 0.0
    %1237 = vmatpush1.msra.mxu0 0.0
    %1238 = vmatprep.subr.mxu0 0.0
    %1239 = vmatpush1.msra.mxu0 0.0
    %1240 = vmatprep.subr.mxu0 0.0
    %1241 = vmatpush1.msra.mxu0 0.0
    %1242 = vmatprep.subr.mxu0 0.0
    %1243 = vmatpush1.msra.mxu0 0.0
    %1244 = vmatprep.subr.mxu0 0.0
    %1245 = vmatpush1.msra.mxu0 0.0
    %1246 = vmatprep.subr.mxu0 0.0
    %1247 = vmatpush1.msra.mxu0 0.0
    %1248 = vmatprep.subr.mxu0 0.0
    %1249 = vmatpush1.msra.mxu0 0.0
    %1250 = vmatprep.mubr.f32.mxu0 0.0
    %1251 = vmatmul.mubr.f32.gmra.mrb[0].mxu0 %v1184
    %v1252 = vpop.f32.mrb[0].mxu0
    %v1253 = vadd.f32 0.0, %v1252
    %v1254 = vpop.f32.mrb[0].mxu0
    %1255 = vdwg.mxu0
    %1257 = vrot.lane.b32.xlu0 %v1253, 96
    %v1258 = vpop.permute.xlu0 %1257
    %v1260 = vadd.f32 %v956, %v1258
    %v1261 = vxor.u32 %v1260, 2147483648
    %v1262 = vmul.f32 %v1261, 1.442695
    %v1263 = vpow.pop %v1262
    %v1264 = vadd.f32 %v1263, 1.0
    %v1265 = vrcp.pop %v1264
    %v1266 = vmul.f32 1.0, %v1265
    %v1267 = vadd.f32 %v1253, %v1050
    %1269 = vrot.lane.b32.xlu0 %v1267, 64
    %v1270 = vpop.permute.xlu0 %1269
    %v1272 = vmul.f32 %v1266, %v1270
    %1274 = vrot.lane.b32.xlu0 %v1272, 32
    %v1275 = vpop.permute.xlu0 %1274
    %v1277 = vadd.f32 %v958, %v1275
    %v1278 = vtanh.pop %v1277
    %v1279 = vsub.f32 1.0, %v1266
    %1281 = vrot.lane.b32.xlu0 %v1278, 112
    %v1282 = vpop.permute.xlu0 %1281
    %v1284 = vmul.f32 %v1279, %v1282
    %1285 = vrot.lane.b32.xlu0 %v1180, 48
    %v1286 = vpop.permute.xlu0 %1285
    %v1288 = vmul.f32 %v1266, %v1286
    %v1289 = vadd.f32 %v1284, %v1288
    %1291 = vrot.lane.b32.xlu0 %v1289, 16
    %v1292 = vpop.permute.xlu0 %1291
    %v1293 = vsel %vm963, %v1292, 0
    %1295 = vmatprep.subr.mxu0 0.0
    %1296 = vmatpush1.msra.mxu0 %v960
    %1297 = vmatprep.subr.mxu0 0.0
    %1298 = vmatpush1.msra.mxu0 %v961
    %1299 = vmatprep.subr.mxu0 0.0
    %1300 = vmatpush1.msra.mxu0 0.0
    %1301 = vmatprep.subr.mxu0 0.0
    %1302 = vmatpush1.msra.mxu0 0.0
    %1303 = vmatprep.subr.mxu0 0.0
    %1304 = vmatpush1.msra.mxu0 0.0
    %1305 = vmatprep.subr.mxu0 0.0
    %1306 = vmatpush1.msra.mxu0 0.0
    %1307 = vmatprep.subr.mxu0 0.0
    %1308 = vmatpush1.msra.mxu0 0.0
    %1309 = vmatprep.subr.mxu0 0.0
    %1310 = vmatpush1.msra.mxu0 0.0
    %1311 = vmatprep.subr.mxu0 0.0
    %1312 = vmatpush1.msra.mxu0 0.0
    %1313 = vmatprep.subr.mxu0 0.0
    %1314 = vmatpush1.msra.mxu0 0.0
    %1315 = vmatprep.subr.mxu0 0.0
    %1316 = vmatpush1.msra.mxu0 0.0
    %1317 = vmatprep.subr.mxu0 0.0
    %1318 = vmatpush1.msra.mxu0 0.0
    %1319 = vmatprep.subr.mxu0 0.0
    %1320 = vmatpush1.msra.mxu0 0.0
    %1321 = vmatprep.subr.mxu0 0.0
    %1322 = vmatpush1.msra.mxu0 0.0
    %1323 = vmatprep.subr.mxu0 0.0
    %1324 = vmatpush1.msra.mxu0 0.0
    %1325 = vmatprep.subr.mxu0 0.0
    %1326 = vmatpush1.msra.mxu0 0.0
    %1327 = vmatprep.subr.mxu0 0.0
    %1328 = vmatpush1.msra.mxu0 0.0
    %1329 = vmatprep.subr.mxu0 0.0
    %1330 = vmatpush1.msra.mxu0 0.0
    %1331 = vmatprep.subr.mxu0 0.0
    %1332 = vmatpush1.msra.mxu0 0.0
    %1333 = vmatprep.subr.mxu0 0.0
    %1334 = vmatpush1.msra.mxu0 0.0
    %1335 = vmatprep.subr.mxu0 0.0
    %1336 = vmatpush1.msra.mxu0 0.0
    %1337 = vmatprep.subr.mxu0 0.0
    %1338 = vmatpush1.msra.mxu0 0.0
    %1339 = vmatprep.subr.mxu0 0.0
    %1340 = vmatpush1.msra.mxu0 0.0
    %1341 = vmatprep.subr.mxu0 0.0
    %1342 = vmatpush1.msra.mxu0 0.0
    %1343 = vmatprep.subr.mxu0 0.0
    %1344 = vmatpush1.msra.mxu0 0.0
    %1345 = vmatprep.subr.mxu0 0.0
    %1346 = vmatpush1.msra.mxu0 0.0
    %1347 = vmatprep.subr.mxu0 0.0
    %1348 = vmatpush1.msra.mxu0 0.0
    %1349 = vmatprep.subr.mxu0 0.0
    %1350 = vmatpush1.msra.mxu0 0.0
    %1351 = vmatprep.subr.mxu0 0.0
    %1352 = vmatpush1.msra.mxu0 0.0
    %1353 = vmatprep.subr.mxu0 0.0
    %1354 = vmatpush1.msra.mxu0 0.0
    %1355 = vmatprep.subr.mxu0 0.0
    %1356 = vmatpush1.msra.mxu0 0.0
    %1357 = vmatprep.subr.mxu0 0.0
    %1358 = vmatpush1.msra.mxu0 0.0
    %1359 = vmatprep.mubr.f32.mxu0 0.0
    %1360 = vmatmul.mubr.f32.gmra.mrb[0].mxu0 %v1293
    %v1361 = vpop.f32.mrb[0].mxu0
    %v1362 = vadd.f32 0.0, %v1361
    %v1363 = vpop.f32.mrb[0].mxu0
    %1364 = vdwg.mxu0
    %1366 = vrot.lane.b32.xlu0 %v1362, 16
    %v1367 = vpop.permute.xlu0 %1366
    %v1369 = vadd.f32 %v958, %v1367
    %v1370 = vxor.u32 %v1369, 2147483648
    %v1371 = vmul.f32 %v1370, 1.442695
    %v1372 = vpow.pop %v1371
    %v1373 = vadd.f32 %v1372, 1.0
    %v1374 = vrcp.pop %v1373
    %v1375 = vmul.f32 1.0, %v1374
    %v1376 = vadd.f32 %v1362, %v1050
    %1378 = vrot.lane.b32.xlu0 %v1376, 112
    %v1379 = vpop.permute.xlu0 %1378
    %v1381 = vmul.f32 %v1375, %v1379
    %1383 = vrot.lane.b32.xlu0 %v1381, 32
    %v1384 = vpop.permute.xlu0 %1383
    %v1386 = vadd.f32 %v958, %v1384
    %v1387 = vtanh.pop %v1386
    %v1388 = vsub.f32 1.0, %v1375
    %1390 = vrot.lane.b32.xlu0 %v1387, 112
    %v1391 = vpop.permute.xlu0 %1390
    %v1393 = vmul.f32 %v1388, %v1391
    %1394 = vrot.lane.b32.xlu0 %v1289, 48
    %v1395 = vpop.permute.xlu0 %1394
    %v1397 = vmul.f32 %v1375, %v1395
    %v1398 = vadd.f32 %v1393, %v1397
    %1400 = vrot.lane.b32.xlu0 %v1398, 96
    %v1401 = vpop.permute.xlu0 %1400
    %1403 = vst.msk [vmem:[#allocation10] sm:$0xff] %vm963, %v1401
    // Predicated region
    $region78: #{_lambda_.1} parent=1 // pred_check
      _
    $region79: #{_lambda_.1} parent=1 // pred_check_branch
      %1405 = sbr.rel (0) target = $region81
    $region80: #{_lambda_.1} parent=1 // pred_region
      %s1407 = ssub.s32 128, 128
      %1408 = vsyncadd [#allocation4], %s1407
      %s1410 = sshll.u32 [#allocation10], 4
      %s1411 = int_to_ptr.vmem [resolvable:$true] %s1410
      %1413 = dma.vmem_to_hbm [thread:$0]  %s1411, 128, %s15, [#allocation4]
    $region81: #{_lambda_.1} parent=1 // pred_fallthru
      _
    // Predicated region
    $region82: #{_lambda_.1} parent=1 // pred_check
      _
    $region83: #{_lambda_.1} parent=1 // pred_check_branch
      %1415 = sbr.rel (0) target = $region85
    $region84: #{_lambda_.1} parent=1 // pred_region
      %1416 = dma.done [#allocation4], 128
    $region85: #{_lambda_.1} parent=1 // pred_fallthru
      _
    %1417 = vsyncpa [#allocation3], 1
    %1418 = vsyncpa [#allocation6], 1
    %1419 = vsyncpa [#allocation9], 1
    %1420 = vsyncpa [#allocation4], 1

</llo_original>
